<compile_context>
chip_gen: v6e
topology: v6e:2x2x1
jax: 0.10.0
libtpu: 0.0.40
codegen_flags: <defaults>
</compile_context>

<pallas_src>
import functools

import jax
import jax.numpy as jnp
from jax.experimental import pallas as pl
from jax.experimental.pallas import tpu as pltpu

N_FEATURES = 4
LAYER_DIMS = [(N_FEATURES, 8), (8, 6), (6, 4), (4, 3),   # encoder en1..en4
              (3, 4), (4, 6), (6, 8), (8, N_FEATURES)]   # decoder de1..de4
N_PARAMS = sum(fi * fo + fo for fi, fo in LAYER_DIMS)    # = 275 f32 scalars


def _round_up(a, m):
    return ((a + m - 1) // m) * m


def _ae_kernel(params_ref, x_ref, o_ref):
    """params_ref: (N_PARAMS,) f32 in SMEM (resident across all grid steps).
    x_ref / o_ref: (N_FEATURES, TILE_R, 128) f32 tiles in VMEM (batch on lanes)."""
    # Current activations: list of (TILE_R, 128) lane-dense slabs, one per feature.
    h = [x_ref[k] for k in range(N_FEATURES)]

    off = 0
    last = len(LAYER_DIMS) - 1
    for li, (fin, fout) in enumerate(LAYER_DIMS):
        w_off = off                 # w stored row-major as [fin, fout]
        b_off = off + fin * fout
        off = b_off + fout
        new_h = []
        for o in range(fout):
            # Pure VPU broadcast-MAC over the tiny contraction dim (no MXU).
            acc = h[0] * params_ref[w_off + o]
            for k in range(1, fin):
                acc = acc + h[k] * params_ref[w_off + k * fout + o]
            acc = acc + params_ref[b_off + o]
            # tanh after every layer except the final de4 (the latent gets its
            # tanh at the start of decode, exactly like the PyTorch module).
            if li != last:
                acc = jnp.tanh(acc)
            new_h.append(acc)
        h = new_h

    for o in range(N_FEATURES):
        o_ref[o] = h[o]


def _pack_params(params):
    """Flatten [(w[in,out], b[1,out]), ...] into one (N_PARAMS,) f32 vector."""
    flat = []
    for w, b in params:
        flat.append(jnp.asarray(w, jnp.float32).reshape(-1))
        flat.append(jnp.asarray(b, jnp.float32).reshape(-1))
    return jnp.concatenate(flat)


@functools.partial(jax.jit, static_argnames=("tile_rows",))
def ae_big_forward(x, params, *, tile_rows=128):
    """x: [B, N_FEATURES] float32; params: list of (w [in,out], b [1,out])."""
    B = x.shape[0]
    packed = _pack_params(params)
    assert packed.shape[0] == N_PARAMS

    # Batch -> lane-dense 3D layout: (features, rows, 128) with rows tiled.
    r_min = max(1, pl.cdiv(B, 128))
    tile_r = _round_up(min(tile_rows, _round_up(r_min, 8)), 8)
    r_total = _round_up(r_min, tile_r)
    b_pad = r_total * 128

    xp = jnp.zeros((b_pad, N_FEATURES), jnp.float32).at[:B].set(
        x.astype(jnp.float32))
    x3 = xp.T.reshape(N_FEATURES, r_total, 128)       # batch on the lane axis

    blk = (N_FEATURES, tile_r, 128)
    grid = (r_total // tile_r,)

    out3 = pl.pallas_call(
        _ae_kernel,
        out_shape=jax.ShapeDtypeStruct((N_FEATURES, r_total, 128), jnp.float32),
        grid_spec=pltpu.PrefetchScalarGridSpec(
            num_scalar_prefetch=0,
            grid=grid,
            in_specs=[
                # All weights/biases: one small SMEM-resident vector.
                pl.BlockSpec(memory_space=pltpu.MemorySpace.SMEM),
                # Batch tile of activations (auto double-buffered pipeline).
                pl.BlockSpec(blk, lambda i: (0, i, 0)),
            ],
            out_specs=pl.BlockSpec(blk, lambda i: (0, i, 0)),
        ),
        compiler_params=pltpu.CompilerParams(
            dimension_semantics=("parallel",),
            vmem_limit_bytes=32 * 1024 * 1024,
        ),
    )(packed, x3)

    return out3.reshape(N_FEATURES, b_pad).T[:B]


def init_params(key):
    """Deterministic PyTorch-style init: U(-1/sqrt(fan_in), 1/sqrt(fan_in))."""
    params = []
    for (fan_in, fan_out) in LAYER_DIMS:
        key, kw, kb = jax.random.split(key, 3)
        bound = 1.0 / jnp.sqrt(jnp.float32(fan_in))
        w = jax.random.uniform(kw, (fan_in, fan_out), jnp.float32,
                               minval=-bound, maxval=bound)
        b = jax.random.uniform(kb, (1, fan_out), jnp.float32,
                               minval=-bound, maxval=bound)
        params.append((w, b))
    return params


def ae_big_reference(x, params):
    """Pure-JAX reference of the same forward pass."""
    def lin(h, wb):
        w, b = wb
        return h @ w + b
    h = jnp.tanh(lin(x, params[0]))
    h = jnp.tanh(lin(h, params[1]))
    h = jnp.tanh(lin(h, params[2]))
    z = lin(h, params[3])
    h = jnp.tanh(z)
    h = jnp.tanh(lin(h, params[4]))
    h = jnp.tanh(lin(h, params[5]))
    h = jnp.tanh(lin(h, params[6]))
    return lin(h, params[7])


if __name__ == "__main__":
    key = jax.random.PRNGKey(0)
    key, kx = jax.random.split(key)
    params = init_params(key)

    # Small demo batch (single tile).
    B = 8
    x = jax.random.normal(kx, (B, N_FEATURES), jnp.float32)
    out = jax.block_until_ready(ae_big_forward(x, params))
    ref = ae_big_reference(x, params)
    assert out.shape == (B, N_FEATURES)
    assert jnp.allclose(out, ref, atol=1e-4, rtol=1e-4)

    # Exercise the multi-tile, pipelined grid path (3 batch tiles of 1024 rows).
    B2 = 2500
    x2 = jax.random.normal(jax.random.PRNGKey(1), (B2, N_FEATURES), jnp.float32)
    out2 = jax.block_until_ready(ae_big_forward(x2, params, tile_rows=8))
    ref2 = ae_big_reference(x2, params)
    assert out2.shape == (B2, N_FEATURES)
    assert jnp.allclose(out2, ref2, atol=1e-4, rtol=1e-4)

    print("KERNEL_OK")
</pallas_src>

<mosaic_0001>
module attributes {stable_mosaic.version = 11 : i64} {
  func.func @_ae_kernel(%arg0: i32, %arg1: memref<275xf32, #tpu.memory_space<smem>>, %arg2: memref<4x8x128xf32, #tpu.memory_space<vmem>>, %arg3: memref<4x8x128xf32, #tpu.memory_space<vmem>>) attributes {dimension_semantics = [#tpu.dimension_semantics<parallel>], iteration_bounds = array<i64: 1>, scalar_prefetch = 0 : i64, scratch_operands = 0 : i64, tpu.core_type = #tpu.core_type<tc>, window_params = [{transform_indices = @transform_0, window_bounds = array<i64: 275>}, {transform_indices = @transform_1, window_bounds = array<i64: 4, 8, 128>}, {transform_indices = @transform_2, window_bounds = array<i64: 4, 8, 128>}]} {
    %c0 = arith.constant 0 : index
    %c0_0 = arith.constant 0 : index
    %c0_1 = arith.constant 0 : index
    %0 = vector.load %arg2[%c0, %c0_0, %c0_1] : memref<4x8x128xf32, #tpu.memory_space<vmem>>, vector<1x8x128xf32>
    %1 = vector.shape_cast %0 : vector<1x8x128xf32> to vector<8x128xf32>
    %c1 = arith.constant 1 : index
    %c0_2 = arith.constant 0 : index
    %c0_3 = arith.constant 0 : index
    %2 = vector.load %arg2[%c1, %c0_2, %c0_3] : memref<4x8x128xf32, #tpu.memory_space<vmem>>, vector<1x8x128xf32>
    %3 = vector.shape_cast %2 : vector<1x8x128xf32> to vector<8x128xf32>
    %c2 = arith.constant 2 : index
    %c0_4 = arith.constant 0 : index
    %c0_5 = arith.constant 0 : index
    %4 = vector.load %arg2[%c2, %c0_4, %c0_5] : memref<4x8x128xf32, #tpu.memory_space<vmem>>, vector<1x8x128xf32>
    %5 = vector.shape_cast %4 : vector<1x8x128xf32> to vector<8x128xf32>
    %c3 = arith.constant 3 : index
    %c0_6 = arith.constant 0 : index
    %c0_7 = arith.constant 0 : index
    %6 = vector.load %arg2[%c3, %c0_6, %c0_7] : memref<4x8x128xf32, #tpu.memory_space<vmem>>, vector<1x8x128xf32>
    %7 = vector.shape_cast %6 : vector<1x8x128xf32> to vector<8x128xf32>
    %c0_8 = arith.constant 0 : index
    %8 = memref.load %arg1[%c0_8] : memref<275xf32, #tpu.memory_space<smem>>
    %9 = vector.broadcast %8 : f32 to vector<8x128xf32>
    %10 = arith.mulf %1, %9 : vector<8x128xf32>
    %c8 = arith.constant 8 : index
    %11 = memref.load %arg1[%c8] : memref<275xf32, #tpu.memory_space<smem>>
    %12 = vector.broadcast %11 : f32 to vector<8x128xf32>
    %13 = arith.mulf %3, %12 : vector<8x128xf32>
    %14 = arith.addf %10, %13 : vector<8x128xf32>
    %c16 = arith.constant 16 : index
    %15 = memref.load %arg1[%c16] : memref<275xf32, #tpu.memory_space<smem>>
    %16 = vector.broadcast %15 : f32 to vector<8x128xf32>
    %17 = arith.mulf %5, %16 : vector<8x128xf32>
    %18 = arith.addf %14, %17 : vector<8x128xf32>
    %c24 = arith.constant 24 : index
    %19 = memref.load %arg1[%c24] : memref<275xf32, #tpu.memory_space<smem>>
    %20 = vector.broadcast %19 : f32 to vector<8x128xf32>
    %21 = arith.mulf %7, %20 : vector<8x128xf32>
    %22 = arith.addf %18, %21 : vector<8x128xf32>
    %c32 = arith.constant 32 : index
    %23 = memref.load %arg1[%c32] : memref<275xf32, #tpu.memory_space<smem>>
    %24 = vector.broadcast %23 : f32 to vector<8x128xf32>
    %25 = arith.addf %22, %24 : vector<8x128xf32>
    %26 = math.tanh %25 : vector<8x128xf32>
    %c1_9 = arith.constant 1 : index
    %27 = memref.load %arg1[%c1_9] : memref<275xf32, #tpu.memory_space<smem>>
    %28 = vector.broadcast %27 : f32 to vector<8x128xf32>
    %29 = arith.mulf %1, %28 : vector<8x128xf32>
    %c9 = arith.constant 9 : index
    %30 = memref.load %arg1[%c9] : memref<275xf32, #tpu.memory_space<smem>>
    %31 = vector.broadcast %30 : f32 to vector<8x128xf32>
    %32 = arith.mulf %3, %31 : vector<8x128xf32>
    %33 = arith.addf %29, %32 : vector<8x128xf32>
    %c17 = arith.constant 17 : index
    %34 = memref.load %arg1[%c17] : memref<275xf32, #tpu.memory_space<smem>>
    %35 = vector.broadcast %34 : f32 to vector<8x128xf32>
    %36 = arith.mulf %5, %35 : vector<8x128xf32>
    %37 = arith.addf %33, %36 : vector<8x128xf32>
    %c25 = arith.constant 25 : index
    %38 = memref.load %arg1[%c25] : memref<275xf32, #tpu.memory_space<smem>>
    %39 = vector.broadcast %38 : f32 to vector<8x128xf32>
    %40 = arith.mulf %7, %39 : vector<8x128xf32>
    %41 = arith.addf %37, %40 : vector<8x128xf32>
    %c33 = arith.constant 33 : index
    %42 = memref.load %arg1[%c33] : memref<275xf32, #tpu.memory_space<smem>>
    %43 = vector.broadcast %42 : f32 to vector<8x128xf32>
    %44 = arith.addf %41, %43 : vector<8x128xf32>
    %45 = math.tanh %44 : vector<8x128xf32>
    %c2_10 = arith.constant 2 : index
    %46 = memref.load %arg1[%c2_10] : memref<275xf32, #tpu.memory_space<smem>>
    %47 = vector.broadcast %46 : f32 to vector<8x128xf32>
    %48 = arith.mulf %1, %47 : vector<8x128xf32>
    %c10 = arith.constant 10 : index
    %49 = memref.load %arg1[%c10] : memref<275xf32, #tpu.memory_space<smem>>
    %50 = vector.broadcast %49 : f32 to vector<8x128xf32>
    %51 = arith.mulf %3, %50 : vector<8x128xf32>
    %52 = arith.addf %48, %51 : vector<8x128xf32>
    %c18 = arith.constant 18 : index
    %53 = memref.load %arg1[%c18] : memref<275xf32, #tpu.memory_space<smem>>
    %54 = vector.broadcast %53 : f32 to vector<8x128xf32>
    %55 = arith.mulf %5, %54 : vector<8x128xf32>
    %56 = arith.addf %52, %55 : vector<8x128xf32>
    %c26 = arith.constant 26 : index
    %57 = memref.load %arg1[%c26] : memref<275xf32, #tpu.memory_space<smem>>
    %58 = vector.broadcast %57 : f32 to vector<8x128xf32>
    %59 = arith.mulf %7, %58 : vector<8x128xf32>
    %60 = arith.addf %56, %59 : vector<8x128xf32>
    %c34 = arith.constant 34 : index
    %61 = memref.load %arg1[%c34] : memref<275xf32, #tpu.memory_space<smem>>
    %62 = vector.broadcast %61 : f32 to vector<8x128xf32>
    %63 = arith.addf %60, %62 : vector<8x128xf32>
    %64 = math.tanh %63 : vector<8x128xf32>
    %c3_11 = arith.constant 3 : index
    %65 = memref.load %arg1[%c3_11] : memref<275xf32, #tpu.memory_space<smem>>
    %66 = vector.broadcast %65 : f32 to vector<8x128xf32>
    %67 = arith.mulf %1, %66 : vector<8x128xf32>
    %c11 = arith.constant 11 : index
    %68 = memref.load %arg1[%c11] : memref<275xf32, #tpu.memory_space<smem>>
    %69 = vector.broadcast %68 : f32 to vector<8x128xf32>
    %70 = arith.mulf %3, %69 : vector<8x128xf32>
    %71 = arith.addf %67, %70 : vector<8x128xf32>
    %c19 = arith.constant 19 : index
    %72 = memref.load %arg1[%c19] : memref<275xf32, #tpu.memory_space<smem>>
    %73 = vector.broadcast %72 : f32 to vector<8x128xf32>
    %74 = arith.mulf %5, %73 : vector<8x128xf32>
    %75 = arith.addf %71, %74 : vector<8x128xf32>
    %c27 = arith.constant 27 : index
    %76 = memref.load %arg1[%c27] : memref<275xf32, #tpu.memory_space<smem>>
    %77 = vector.broadcast %76 : f32 to vector<8x128xf32>
    %78 = arith.mulf %7, %77 : vector<8x128xf32>
    %79 = arith.addf %75, %78 : vector<8x128xf32>
    %c35 = arith.constant 35 : index
    %80 = memref.load %arg1[%c35] : memref<275xf32, #tpu.memory_space<smem>>
    %81 = vector.broadcast %80 : f32 to vector<8x128xf32>
    %82 = arith.addf %79, %81 : vector<8x128xf32>
    %83 = math.tanh %82 : vector<8x128xf32>
    %c4 = arith.constant 4 : index
    %84 = memref.load %arg1[%c4] : memref<275xf32, #tpu.memory_space<smem>>
    %85 = vector.broadcast %84 : f32 to vector<8x128xf32>
    %86 = arith.mulf %1, %85 : vector<8x128xf32>
    %c12 = arith.constant 12 : index
    %87 = memref.load %arg1[%c12] : memref<275xf32, #tpu.memory_space<smem>>
    %88 = vector.broadcast %87 : f32 to vector<8x128xf32>
    %89 = arith.mulf %3, %88 : vector<8x128xf32>
    %90 = arith.addf %86, %89 : vector<8x128xf32>
    %c20 = arith.constant 20 : index
    %91 = memref.load %arg1[%c20] : memref<275xf32, #tpu.memory_space<smem>>
    %92 = vector.broadcast %91 : f32 to vector<8x128xf32>
    %93 = arith.mulf %5, %92 : vector<8x128xf32>
    %94 = arith.addf %90, %93 : vector<8x128xf32>
    %c28 = arith.constant 28 : index
    %95 = memref.load %arg1[%c28] : memref<275xf32, #tpu.memory_space<smem>>
    %96 = vector.broadcast %95 : f32 to vector<8x128xf32>
    %97 = arith.mulf %7, %96 : vector<8x128xf32>
    %98 = arith.addf %94, %97 : vector<8x128xf32>
    %c36 = arith.constant 36 : index
    %99 = memref.load %arg1[%c36] : memref<275xf32, #tpu.memory_space<smem>>
    %100 = vector.broadcast %99 : f32 to vector<8x128xf32>
    %101 = arith.addf %98, %100 : vector<8x128xf32>
    %102 = math.tanh %101 : vector<8x128xf32>
    %c5 = arith.constant 5 : index
    %103 = memref.load %arg1[%c5] : memref<275xf32, #tpu.memory_space<smem>>
    %104 = vector.broadcast %103 : f32 to vector<8x128xf32>
    %105 = arith.mulf %1, %104 : vector<8x128xf32>
    %c13 = arith.constant 13 : index
    %106 = memref.load %arg1[%c13] : memref<275xf32, #tpu.memory_space<smem>>
    %107 = vector.broadcast %106 : f32 to vector<8x128xf32>
    %108 = arith.mulf %3, %107 : vector<8x128xf32>
    %109 = arith.addf %105, %108 : vector<8x128xf32>
    %c21 = arith.constant 21 : index
    %110 = memref.load %arg1[%c21] : memref<275xf32, #tpu.memory_space<smem>>
    %111 = vector.broadcast %110 : f32 to vector<8x128xf32>
    %112 = arith.mulf %5, %111 : vector<8x128xf32>
    %113 = arith.addf %109, %112 : vector<8x128xf32>
    %c29 = arith.constant 29 : index
    %114 = memref.load %arg1[%c29] : memref<275xf32, #tpu.memory_space<smem>>
    %115 = vector.broadcast %114 : f32 to vector<8x128xf32>
    %116 = arith.mulf %7, %115 : vector<8x128xf32>
    %117 = arith.addf %113, %116 : vector<8x128xf32>
    %c37 = arith.constant 37 : index
    %118 = memref.load %arg1[%c37] : memref<275xf32, #tpu.memory_space<smem>>
    %119 = vector.broadcast %118 : f32 to vector<8x128xf32>
    %120 = arith.addf %117, %119 : vector<8x128xf32>
    %121 = math.tanh %120 : vector<8x128xf32>
    %c6 = arith.constant 6 : index
    %122 = memref.load %arg1[%c6] : memref<275xf32, #tpu.memory_space<smem>>
    %123 = vector.broadcast %122 : f32 to vector<8x128xf32>
    %124 = arith.mulf %1, %123 : vector<8x128xf32>
    %c14 = arith.constant 14 : index
    %125 = memref.load %arg1[%c14] : memref<275xf32, #tpu.memory_space<smem>>
    %126 = vector.broadcast %125 : f32 to vector<8x128xf32>
    %127 = arith.mulf %3, %126 : vector<8x128xf32>
    %128 = arith.addf %124, %127 : vector<8x128xf32>
    %c22 = arith.constant 22 : index
    %129 = memref.load %arg1[%c22] : memref<275xf32, #tpu.memory_space<smem>>
    %130 = vector.broadcast %129 : f32 to vector<8x128xf32>
    %131 = arith.mulf %5, %130 : vector<8x128xf32>
    %132 = arith.addf %128, %131 : vector<8x128xf32>
    %c30 = arith.constant 30 : index
    %133 = memref.load %arg1[%c30] : memref<275xf32, #tpu.memory_space<smem>>
    %134 = vector.broadcast %133 : f32 to vector<8x128xf32>
    %135 = arith.mulf %7, %134 : vector<8x128xf32>
    %136 = arith.addf %132, %135 : vector<8x128xf32>
    %c38 = arith.constant 38 : index
    %137 = memref.load %arg1[%c38] : memref<275xf32, #tpu.memory_space<smem>>
    %138 = vector.broadcast %137 : f32 to vector<8x128xf32>
    %139 = arith.addf %136, %138 : vector<8x128xf32>
    %140 = math.tanh %139 : vector<8x128xf32>
    %c7 = arith.constant 7 : index
    %141 = memref.load %arg1[%c7] : memref<275xf32, #tpu.memory_space<smem>>
    %142 = vector.broadcast %141 : f32 to vector<8x128xf32>
    %143 = arith.mulf %1, %142 : vector<8x128xf32>
    %c15 = arith.constant 15 : index
    %144 = memref.load %arg1[%c15] : memref<275xf32, #tpu.memory_space<smem>>
    %145 = vector.broadcast %144 : f32 to vector<8x128xf32>
    %146 = arith.mulf %3, %145 : vector<8x128xf32>
    %147 = arith.addf %143, %146 : vector<8x128xf32>
    %c23 = arith.constant 23 : index
    %148 = memref.load %arg1[%c23] : memref<275xf32, #tpu.memory_space<smem>>
    %149 = vector.broadcast %148 : f32 to vector<8x128xf32>
    %150 = arith.mulf %5, %149 : vector<8x128xf32>
    %151 = arith.addf %147, %150 : vector<8x128xf32>
    %c31 = arith.constant 31 : index
    %152 = memref.load %arg1[%c31] : memref<275xf32, #tpu.memory_space<smem>>
    %153 = vector.broadcast %152 : f32 to vector<8x128xf32>
    %154 = arith.mulf %7, %153 : vector<8x128xf32>
    %155 = arith.addf %151, %154 : vector<8x128xf32>
    %c39 = arith.constant 39 : index
    %156 = memref.load %arg1[%c39] : memref<275xf32, #tpu.memory_space<smem>>
    %157 = vector.broadcast %156 : f32 to vector<8x128xf32>
    %158 = arith.addf %155, %157 : vector<8x128xf32>
    %159 = math.tanh %158 : vector<8x128xf32>
    %c40 = arith.constant 40 : index
    %160 = memref.load %arg1[%c40] : memref<275xf32, #tpu.memory_space<smem>>
    %161 = vector.broadcast %160 : f32 to vector<8x128xf32>
    %162 = arith.mulf %26, %161 : vector<8x128xf32>
    %c46 = arith.constant 46 : index
    %163 = memref.load %arg1[%c46] : memref<275xf32, #tpu.memory_space<smem>>
    %164 = vector.broadcast %163 : f32 to vector<8x128xf32>
    %165 = arith.mulf %45, %164 : vector<8x128xf32>
    %166 = arith.addf %162, %165 : vector<8x128xf32>
    %c52 = arith.constant 52 : index
    %167 = memref.load %arg1[%c52] : memref<275xf32, #tpu.memory_space<smem>>
    %168 = vector.broadcast %167 : f32 to vector<8x128xf32>
    %169 = arith.mulf %64, %168 : vector<8x128xf32>
    %170 = arith.addf %166, %169 : vector<8x128xf32>
    %c58 = arith.constant 58 : index
    %171 = memref.load %arg1[%c58] : memref<275xf32, #tpu.memory_space<smem>>
    %172 = vector.broadcast %171 : f32 to vector<8x128xf32>
    %173 = arith.mulf %83, %172 : vector<8x128xf32>
    %174 = arith.addf %170, %173 : vector<8x128xf32>
    %c64 = arith.constant 64 : index
    %175 = memref.load %arg1[%c64] : memref<275xf32, #tpu.memory_space<smem>>
    %176 = vector.broadcast %175 : f32 to vector<8x128xf32>
    %177 = arith.mulf %102, %176 : vector<8x128xf32>
    %178 = arith.addf %174, %177 : vector<8x128xf32>
    %c70 = arith.constant 70 : index
    %179 = memref.load %arg1[%c70] : memref<275xf32, #tpu.memory_space<smem>>
    %180 = vector.broadcast %179 : f32 to vector<8x128xf32>
    %181 = arith.mulf %121, %180 : vector<8x128xf32>
    %182 = arith.addf %178, %181 : vector<8x128xf32>
    %c76 = arith.constant 76 : index
    %183 = memref.load %arg1[%c76] : memref<275xf32, #tpu.memory_space<smem>>
    %184 = vector.broadcast %183 : f32 to vector<8x128xf32>
    %185 = arith.mulf %140, %184 : vector<8x128xf32>
    %186 = arith.addf %182, %185 : vector<8x128xf32>
    %c82 = arith.constant 82 : index
    %187 = memref.load %arg1[%c82] : memref<275xf32, #tpu.memory_space<smem>>
    %188 = vector.broadcast %187 : f32 to vector<8x128xf32>
    %189 = arith.mulf %159, %188 : vector<8x128xf32>
    %190 = arith.addf %186, %189 : vector<8x128xf32>
    %c88 = arith.constant 88 : index
    %191 = memref.load %arg1[%c88] : memref<275xf32, #tpu.memory_space<smem>>
    %192 = vector.broadcast %191 : f32 to vector<8x128xf32>
    %193 = arith.addf %190, %192 : vector<8x128xf32>
    %194 = math.tanh %193 : vector<8x128xf32>
    %c41 = arith.constant 41 : index
    %195 = memref.load %arg1[%c41] : memref<275xf32, #tpu.memory_space<smem>>
    %196 = vector.broadcast %195 : f32 to vector<8x128xf32>
    %197 = arith.mulf %26, %196 : vector<8x128xf32>
    %c47 = arith.constant 47 : index
    %198 = memref.load %arg1[%c47] : memref<275xf32, #tpu.memory_space<smem>>
    %199 = vector.broadcast %198 : f32 to vector<8x128xf32>
    %200 = arith.mulf %45, %199 : vector<8x128xf32>
    %201 = arith.addf %197, %200 : vector<8x128xf32>
    %c53 = arith.constant 53 : index
    %202 = memref.load %arg1[%c53] : memref<275xf32, #tpu.memory_space<smem>>
    %203 = vector.broadcast %202 : f32 to vector<8x128xf32>
    %204 = arith.mulf %64, %203 : vector<8x128xf32>
    %205 = arith.addf %201, %204 : vector<8x128xf32>
    %c59 = arith.constant 59 : index
    %206 = memref.load %arg1[%c59] : memref<275xf32, #tpu.memory_space<smem>>
    %207 = vector.broadcast %206 : f32 to vector<8x128xf32>
    %208 = arith.mulf %83, %207 : vector<8x128xf32>
    %209 = arith.addf %205, %208 : vector<8x128xf32>
    %c65 = arith.constant 65 : index
    %210 = memref.load %arg1[%c65] : memref<275xf32, #tpu.memory_space<smem>>
    %211 = vector.broadcast %210 : f32 to vector<8x128xf32>
    %212 = arith.mulf %102, %211 : vector<8x128xf32>
    %213 = arith.addf %209, %212 : vector<8x128xf32>
    %c71 = arith.constant 71 : index
    %214 = memref.load %arg1[%c71] : memref<275xf32, #tpu.memory_space<smem>>
    %215 = vector.broadcast %214 : f32 to vector<8x128xf32>
    %216 = arith.mulf %121, %215 : vector<8x128xf32>
    %217 = arith.addf %213, %216 : vector<8x128xf32>
    %c77 = arith.constant 77 : index
    %218 = memref.load %arg1[%c77] : memref<275xf32, #tpu.memory_space<smem>>
    %219 = vector.broadcast %218 : f32 to vector<8x128xf32>
    %220 = arith.mulf %140, %219 : vector<8x128xf32>
    %221 = arith.addf %217, %220 : vector<8x128xf32>
    %c83 = arith.constant 83 : index
    %222 = memref.load %arg1[%c83] : memref<275xf32, #tpu.memory_space<smem>>
    %223 = vector.broadcast %222 : f32 to vector<8x128xf32>
    %224 = arith.mulf %159, %223 : vector<8x128xf32>
    %225 = arith.addf %221, %224 : vector<8x128xf32>
    %c89 = arith.constant 89 : index
    %226 = memref.load %arg1[%c89] : memref<275xf32, #tpu.memory_space<smem>>
    %227 = vector.broadcast %226 : f32 to vector<8x128xf32>
    %228 = arith.addf %225, %227 : vector<8x128xf32>
    %229 = math.tanh %228 : vector<8x128xf32>
    %c42 = arith.constant 42 : index
    %230 = memref.load %arg1[%c42] : memref<275xf32, #tpu.memory_space<smem>>
    %231 = vector.broadcast %230 : f32 to vector<8x128xf32>
    %232 = arith.mulf %26, %231 : vector<8x128xf32>
    %c48 = arith.constant 48 : index
    %233 = memref.load %arg1[%c48] : memref<275xf32, #tpu.memory_space<smem>>
    %234 = vector.broadcast %233 : f32 to vector<8x128xf32>
    %235 = arith.mulf %45, %234 : vector<8x128xf32>
    %236 = arith.addf %232, %235 : vector<8x128xf32>
    %c54 = arith.constant 54 : index
    %237 = memref.load %arg1[%c54] : memref<275xf32, #tpu.memory_space<smem>>
    %238 = vector.broadcast %237 : f32 to vector<8x128xf32>
    %239 = arith.mulf %64, %238 : vector<8x128xf32>
    %240 = arith.addf %236, %239 : vector<8x128xf32>
    %c60 = arith.constant 60 : index
    %241 = memref.load %arg1[%c60] : memref<275xf32, #tpu.memory_space<smem>>
    %242 = vector.broadcast %241 : f32 to vector<8x128xf32>
    %243 = arith.mulf %83, %242 : vector<8x128xf32>
    %244 = arith.addf %240, %243 : vector<8x128xf32>
    %c66 = arith.constant 66 : index
    %245 = memref.load %arg1[%c66] : memref<275xf32, #tpu.memory_space<smem>>
    %246 = vector.broadcast %245 : f32 to vector<8x128xf32>
    %247 = arith.mulf %102, %246 : vector<8x128xf32>
    %248 = arith.addf %244, %247 : vector<8x128xf32>
    %c72 = arith.constant 72 : index
    %249 = memref.load %arg1[%c72] : memref<275xf32, #tpu.memory_space<smem>>
    %250 = vector.broadcast %249 : f32 to vector<8x128xf32>
    %251 = arith.mulf %121, %250 : vector<8x128xf32>
    %252 = arith.addf %248, %251 : vector<8x128xf32>
    %c78 = arith.constant 78 : index
    %253 = memref.load %arg1[%c78] : memref<275xf32, #tpu.memory_space<smem>>
    %254 = vector.broadcast %253 : f32 to vector<8x128xf32>
    %255 = arith.mulf %140, %254 : vector<8x128xf32>
    %256 = arith.addf %252, %255 : vector<8x128xf32>
    %c84 = arith.constant 84 : index
    %257 = memref.load %arg1[%c84] : memref<275xf32, #tpu.memory_space<smem>>
    %258 = vector.broadcast %257 : f32 to vector<8x128xf32>
    %259 = arith.mulf %159, %258 : vector<8x128xf32>
    %260 = arith.addf %256, %259 : vector<8x128xf32>
    %c90 = arith.constant 90 : index
    %261 = memref.load %arg1[%c90] : memref<275xf32, #tpu.memory_space<smem>>
    %262 = vector.broadcast %261 : f32 to vector<8x128xf32>
    %263 = arith.addf %260, %262 : vector<8x128xf32>
    %264 = math.tanh %263 : vector<8x128xf32>
    %c43 = arith.constant 43 : index
    %265 = memref.load %arg1[%c43] : memref<275xf32, #tpu.memory_space<smem>>
    %266 = vector.broadcast %265 : f32 to vector<8x128xf32>
    %267 = arith.mulf %26, %266 : vector<8x128xf32>
    %c49 = arith.constant 49 : index
    %268 = memref.load %arg1[%c49] : memref<275xf32, #tpu.memory_space<smem>>
    %269 = vector.broadcast %268 : f32 to vector<8x128xf32>
    %270 = arith.mulf %45, %269 : vector<8x128xf32>
    %271 = arith.addf %267, %270 : vector<8x128xf32>
    %c55 = arith.constant 55 : index
    %272 = memref.load %arg1[%c55] : memref<275xf32, #tpu.memory_space<smem>>
    %273 = vector.broadcast %272 : f32 to vector<8x128xf32>
    %274 = arith.mulf %64, %273 : vector<8x128xf32>
    %275 = arith.addf %271, %274 : vector<8x128xf32>
    %c61 = arith.constant 61 : index
    %276 = memref.load %arg1[%c61] : memref<275xf32, #tpu.memory_space<smem>>
    %277 = vector.broadcast %276 : f32 to vector<8x128xf32>
    %278 = arith.mulf %83, %277 : vector<8x128xf32>
    %279 = arith.addf %275, %278 : vector<8x128xf32>
    %c67 = arith.constant 67 : index
    %280 = memref.load %arg1[%c67] : memref<275xf32, #tpu.memory_space<smem>>
    %281 = vector.broadcast %280 : f32 to vector<8x128xf32>
    %282 = arith.mulf %102, %281 : vector<8x128xf32>
    %283 = arith.addf %279, %282 : vector<8x128xf32>
    %c73 = arith.constant 73 : index
    %284 = memref.load %arg1[%c73] : memref<275xf32, #tpu.memory_space<smem>>
    %285 = vector.broadcast %284 : f32 to vector<8x128xf32>
    %286 = arith.mulf %121, %285 : vector<8x128xf32>
    %287 = arith.addf %283, %286 : vector<8x128xf32>
    %c79 = arith.constant 79 : index
    %288 = memref.load %arg1[%c79] : memref<275xf32, #tpu.memory_space<smem>>
    %289 = vector.broadcast %288 : f32 to vector<8x128xf32>
    %290 = arith.mulf %140, %289 : vector<8x128xf32>
    %291 = arith.addf %287, %290 : vector<8x128xf32>
    %c85 = arith.constant 85 : index
    %292 = memref.load %arg1[%c85] : memref<275xf32, #tpu.memory_space<smem>>
    %293 = vector.broadcast %292 : f32 to vector<8x128xf32>
    %294 = arith.mulf %159, %293 : vector<8x128xf32>
    %295 = arith.addf %291, %294 : vector<8x128xf32>
    %c91 = arith.constant 91 : index
    %296 = memref.load %arg1[%c91] : memref<275xf32, #tpu.memory_space<smem>>
    %297 = vector.broadcast %296 : f32 to vector<8x128xf32>
    %298 = arith.addf %295, %297 : vector<8x128xf32>
    %299 = math.tanh %298 : vector<8x128xf32>
    %c44 = arith.constant 44 : index
    %300 = memref.load %arg1[%c44] : memref<275xf32, #tpu.memory_space<smem>>
    %301 = vector.broadcast %300 : f32 to vector<8x128xf32>
    %302 = arith.mulf %26, %301 : vector<8x128xf32>
    %c50 = arith.constant 50 : index
    %303 = memref.load %arg1[%c50] : memref<275xf32, #tpu.memory_space<smem>>
    %304 = vector.broadcast %303 : f32 to vector<8x128xf32>
    %305 = arith.mulf %45, %304 : vector<8x128xf32>
    %306 = arith.addf %302, %305 : vector<8x128xf32>
    %c56 = arith.constant 56 : index
    %307 = memref.load %arg1[%c56] : memref<275xf32, #tpu.memory_space<smem>>
    %308 = vector.broadcast %307 : f32 to vector<8x128xf32>
    %309 = arith.mulf %64, %308 : vector<8x128xf32>
    %310 = arith.addf %306, %309 : vector<8x128xf32>
    %c62 = arith.constant 62 : index
    %311 = memref.load %arg1[%c62] : memref<275xf32, #tpu.memory_space<smem>>
    %312 = vector.broadcast %311 : f32 to vector<8x128xf32>
    %313 = arith.mulf %83, %312 : vector<8x128xf32>
    %314 = arith.addf %310, %313 : vector<8x128xf32>
    %c68 = arith.constant 68 : index
    %315 = memref.load %arg1[%c68] : memref<275xf32, #tpu.memory_space<smem>>
    %316 = vector.broadcast %315 : f32 to vector<8x128xf32>
    %317 = arith.mulf %102, %316 : vector<8x128xf32>
    %318 = arith.addf %314, %317 : vector<8x128xf32>
    %c74 = arith.constant 74 : index
    %319 = memref.load %arg1[%c74] : memref<275xf32, #tpu.memory_space<smem>>
    %320 = vector.broadcast %319 : f32 to vector<8x128xf32>
    %321 = arith.mulf %121, %320 : vector<8x128xf32>
    %322 = arith.addf %318, %321 : vector<8x128xf32>
    %c80 = arith.constant 80 : index
    %323 = memref.load %arg1[%c80] : memref<275xf32, #tpu.memory_space<smem>>
    %324 = vector.broadcast %323 : f32 to vector<8x128xf32>
    %325 = arith.mulf %140, %324 : vector<8x128xf32>
    %326 = arith.addf %322, %325 : vector<8x128xf32>
    %c86 = arith.constant 86 : index
    %327 = memref.load %arg1[%c86] : memref<275xf32, #tpu.memory_space<smem>>
    %328 = vector.broadcast %327 : f32 to vector<8x128xf32>
    %329 = arith.mulf %159, %328 : vector<8x128xf32>
    %330 = arith.addf %326, %329 : vector<8x128xf32>
    %c92 = arith.constant 92 : index
    %331 = memref.load %arg1[%c92] : memref<275xf32, #tpu.memory_space<smem>>
    %332 = vector.broadcast %331 : f32 to vector<8x128xf32>
    %333 = arith.addf %330, %332 : vector<8x128xf32>
    %334 = math.tanh %333 : vector<8x128xf32>
    %c45 = arith.constant 45 : index
    %335 = memref.load %arg1[%c45] : memref<275xf32, #tpu.memory_space<smem>>
    %336 = vector.broadcast %335 : f32 to vector<8x128xf32>
    %337 = arith.mulf %26, %336 : vector<8x128xf32>
    %c51 = arith.constant 51 : index
    %338 = memref.load %arg1[%c51] : memref<275xf32, #tpu.memory_space<smem>>
    %339 = vector.broadcast %338 : f32 to vector<8x128xf32>
    %340 = arith.mulf %45, %339 : vector<8x128xf32>
    %341 = arith.addf %337, %340 : vector<8x128xf32>
    %c57 = arith.constant 57 : index
    %342 = memref.load %arg1[%c57] : memref<275xf32, #tpu.memory_space<smem>>
    %343 = vector.broadcast %342 : f32 to vector<8x128xf32>
    %344 = arith.mulf %64, %343 : vector<8x128xf32>
    %345 = arith.addf %341, %344 : vector<8x128xf32>
    %c63 = arith.constant 63 : index
    %346 = memref.load %arg1[%c63] : memref<275xf32, #tpu.memory_space<smem>>
    %347 = vector.broadcast %346 : f32 to vector<8x128xf32>
    %348 = arith.mulf %83, %347 : vector<8x128xf32>
    %349 = arith.addf %345, %348 : vector<8x128xf32>
    %c69 = arith.constant 69 : index
    %350 = memref.load %arg1[%c69] : memref<275xf32, #tpu.memory_space<smem>>
    %351 = vector.broadcast %350 : f32 to vector<8x128xf32>
    %352 = arith.mulf %102, %351 : vector<8x128xf32>
    %353 = arith.addf %349, %352 : vector<8x128xf32>
    %c75 = arith.constant 75 : index
    %354 = memref.load %arg1[%c75] : memref<275xf32, #tpu.memory_space<smem>>
    %355 = vector.broadcast %354 : f32 to vector<8x128xf32>
    %356 = arith.mulf %121, %355 : vector<8x128xf32>
    %357 = arith.addf %353, %356 : vector<8x128xf32>
    %c81 = arith.constant 81 : index
    %358 = memref.load %arg1[%c81] : memref<275xf32, #tpu.memory_space<smem>>
    %359 = vector.broadcast %358 : f32 to vector<8x128xf32>
    %360 = arith.mulf %140, %359 : vector<8x128xf32>
    %361 = arith.addf %357, %360 : vector<8x128xf32>
    %c87 = arith.constant 87 : index
    %362 = memref.load %arg1[%c87] : memref<275xf32, #tpu.memory_space<smem>>
    %363 = vector.broadcast %362 : f32 to vector<8x128xf32>
    %364 = arith.mulf %159, %363 : vector<8x128xf32>
    %365 = arith.addf %361, %364 : vector<8x128xf32>
    %c93 = arith.constant 93 : index
    %366 = memref.load %arg1[%c93] : memref<275xf32, #tpu.memory_space<smem>>
    %367 = vector.broadcast %366 : f32 to vector<8x128xf32>
    %368 = arith.addf %365, %367 : vector<8x128xf32>
    %369 = math.tanh %368 : vector<8x128xf32>
    %c94 = arith.constant 94 : index
    %370 = memref.load %arg1[%c94] : memref<275xf32, #tpu.memory_space<smem>>
    %371 = vector.broadcast %370 : f32 to vector<8x128xf32>
    %372 = arith.mulf %194, %371 : vector<8x128xf32>
    %c98 = arith.constant 98 : index
    %373 = memref.load %arg1[%c98] : memref<275xf32, #tpu.memory_space<smem>>
    %374 = vector.broadcast %373 : f32 to vector<8x128xf32>
    %375 = arith.mulf %229, %374 : vector<8x128xf32>
    %376 = arith.addf %372, %375 : vector<8x128xf32>
    %c102 = arith.constant 102 : index
    %377 = memref.load %arg1[%c102] : memref<275xf32, #tpu.memory_space<smem>>
    %378 = vector.broadcast %377 : f32 to vector<8x128xf32>
    %379 = arith.mulf %264, %378 : vector<8x128xf32>
    %380 = arith.addf %376, %379 : vector<8x128xf32>
    %c106 = arith.constant 106 : index
    %381 = memref.load %arg1[%c106] : memref<275xf32, #tpu.memory_space<smem>>
    %382 = vector.broadcast %381 : f32 to vector<8x128xf32>
    %383 = arith.mulf %299, %382 : vector<8x128xf32>
    %384 = arith.addf %380, %383 : vector<8x128xf32>
    %c110 = arith.constant 110 : index
    %385 = memref.load %arg1[%c110] : memref<275xf32, #tpu.memory_space<smem>>
    %386 = vector.broadcast %385 : f32 to vector<8x128xf32>
    %387 = arith.mulf %334, %386 : vector<8x128xf32>
    %388 = arith.addf %384, %387 : vector<8x128xf32>
    %c114 = arith.constant 114 : index
    %389 = memref.load %arg1[%c114] : memref<275xf32, #tpu.memory_space<smem>>
    %390 = vector.broadcast %389 : f32 to vector<8x128xf32>
    %391 = arith.mulf %369, %390 : vector<8x128xf32>
    %392 = arith.addf %388, %391 : vector<8x128xf32>
    %c118 = arith.constant 118 : index
    %393 = memref.load %arg1[%c118] : memref<275xf32, #tpu.memory_space<smem>>
    %394 = vector.broadcast %393 : f32 to vector<8x128xf32>
    %395 = arith.addf %392, %394 : vector<8x128xf32>
    %396 = math.tanh %395 : vector<8x128xf32>
    %c95 = arith.constant 95 : index
    %397 = memref.load %arg1[%c95] : memref<275xf32, #tpu.memory_space<smem>>
    %398 = vector.broadcast %397 : f32 to vector<8x128xf32>
    %399 = arith.mulf %194, %398 : vector<8x128xf32>
    %c99 = arith.constant 99 : index
    %400 = memref.load %arg1[%c99] : memref<275xf32, #tpu.memory_space<smem>>
    %401 = vector.broadcast %400 : f32 to vector<8x128xf32>
    %402 = arith.mulf %229, %401 : vector<8x128xf32>
    %403 = arith.addf %399, %402 : vector<8x128xf32>
    %c103 = arith.constant 103 : index
    %404 = memref.load %arg1[%c103] : memref<275xf32, #tpu.memory_space<smem>>
    %405 = vector.broadcast %404 : f32 to vector<8x128xf32>
    %406 = arith.mulf %264, %405 : vector<8x128xf32>
    %407 = arith.addf %403, %406 : vector<8x128xf32>
    %c107 = arith.constant 107 : index
    %408 = memref.load %arg1[%c107] : memref<275xf32, #tpu.memory_space<smem>>
    %409 = vector.broadcast %408 : f32 to vector<8x128xf32>
    %410 = arith.mulf %299, %409 : vector<8x128xf32>
    %411 = arith.addf %407, %410 : vector<8x128xf32>
    %c111 = arith.constant 111 : index
    %412 = memref.load %arg1[%c111] : memref<275xf32, #tpu.memory_space<smem>>
    %413 = vector.broadcast %412 : f32 to vector<8x128xf32>
    %414 = arith.mulf %334, %413 : vector<8x128xf32>
    %415 = arith.addf %411, %414 : vector<8x128xf32>
    %c115 = arith.constant 115 : index
    %416 = memref.load %arg1[%c115] : memref<275xf32, #tpu.memory_space<smem>>
    %417 = vector.broadcast %416 : f32 to vector<8x128xf32>
    %418 = arith.mulf %369, %417 : vector<8x128xf32>
    %419 = arith.addf %415, %418 : vector<8x128xf32>
    %c119 = arith.constant 119 : index
    %420 = memref.load %arg1[%c119] : memref<275xf32, #tpu.memory_space<smem>>
    %421 = vector.broadcast %420 : f32 to vector<8x128xf32>
    %422 = arith.addf %419, %421 : vector<8x128xf32>
    %423 = math.tanh %422 : vector<8x128xf32>
    %c96 = arith.constant 96 : index
    %424 = memref.load %arg1[%c96] : memref<275xf32, #tpu.memory_space<smem>>
    %425 = vector.broadcast %424 : f32 to vector<8x128xf32>
    %426 = arith.mulf %194, %425 : vector<8x128xf32>
    %c100 = arith.constant 100 : index
    %427 = memref.load %arg1[%c100] : memref<275xf32, #tpu.memory_space<smem>>
    %428 = vector.broadcast %427 : f32 to vector<8x128xf32>
    %429 = arith.mulf %229, %428 : vector<8x128xf32>
    %430 = arith.addf %426, %429 : vector<8x128xf32>
    %c104 = arith.constant 104 : index
    %431 = memref.load %arg1[%c104] : memref<275xf32, #tpu.memory_space<smem>>
    %432 = vector.broadcast %431 : f32 to vector<8x128xf32>
    %433 = arith.mulf %264, %432 : vector<8x128xf32>
    %434 = arith.addf %430, %433 : vector<8x128xf32>
    %c108 = arith.constant 108 : index
    %435 = memref.load %arg1[%c108] : memref<275xf32, #tpu.memory_space<smem>>
    %436 = vector.broadcast %435 : f32 to vector<8x128xf32>
    %437 = arith.mulf %299, %436 : vector<8x128xf32>
    %438 = arith.addf %434, %437 : vector<8x128xf32>
    %c112 = arith.constant 112 : index
    %439 = memref.load %arg1[%c112] : memref<275xf32, #tpu.memory_space<smem>>
    %440 = vector.broadcast %439 : f32 to vector<8x128xf32>
    %441 = arith.mulf %334, %440 : vector<8x128xf32>
    %442 = arith.addf %438, %441 : vector<8x128xf32>
    %c116 = arith.constant 116 : index
    %443 = memref.load %arg1[%c116] : memref<275xf32, #tpu.memory_space<smem>>
    %444 = vector.broadcast %443 : f32 to vector<8x128xf32>
    %445 = arith.mulf %369, %444 : vector<8x128xf32>
    %446 = arith.addf %442, %445 : vector<8x128xf32>
    %c120 = arith.constant 120 : index
    %447 = memref.load %arg1[%c120] : memref<275xf32, #tpu.memory_space<smem>>
    %448 = vector.broadcast %447 : f32 to vector<8x128xf32>
    %449 = arith.addf %446, %448 : vector<8x128xf32>
    %450 = math.tanh %449 : vector<8x128xf32>
    %c97 = arith.constant 97 : index
    %451 = memref.load %arg1[%c97] : memref<275xf32, #tpu.memory_space<smem>>
    %452 = vector.broadcast %451 : f32 to vector<8x128xf32>
    %453 = arith.mulf %194, %452 : vector<8x128xf32>
    %c101 = arith.constant 101 : index
    %454 = memref.load %arg1[%c101] : memref<275xf32, #tpu.memory_space<smem>>
    %455 = vector.broadcast %454 : f32 to vector<8x128xf32>
    %456 = arith.mulf %229, %455 : vector<8x128xf32>
    %457 = arith.addf %453, %456 : vector<8x128xf32>
    %c105 = arith.constant 105 : index
    %458 = memref.load %arg1[%c105] : memref<275xf32, #tpu.memory_space<smem>>
    %459 = vector.broadcast %458 : f32 to vector<8x128xf32>
    %460 = arith.mulf %264, %459 : vector<8x128xf32>
    %461 = arith.addf %457, %460 : vector<8x128xf32>
    %c109 = arith.constant 109 : index
    %462 = memref.load %arg1[%c109] : memref<275xf32, #tpu.memory_space<smem>>
    %463 = vector.broadcast %462 : f32 to vector<8x128xf32>
    %464 = arith.mulf %299, %463 : vector<8x128xf32>
    %465 = arith.addf %461, %464 : vector<8x128xf32>
    %c113 = arith.constant 113 : index
    %466 = memref.load %arg1[%c113] : memref<275xf32, #tpu.memory_space<smem>>
    %467 = vector.broadcast %466 : f32 to vector<8x128xf32>
    %468 = arith.mulf %334, %467 : vector<8x128xf32>
    %469 = arith.addf %465, %468 : vector<8x128xf32>
    %c117 = arith.constant 117 : index
    %470 = memref.load %arg1[%c117] : memref<275xf32, #tpu.memory_space<smem>>
    %471 = vector.broadcast %470 : f32 to vector<8x128xf32>
    %472 = arith.mulf %369, %471 : vector<8x128xf32>
    %473 = arith.addf %469, %472 : vector<8x128xf32>
    %c121 = arith.constant 121 : index
    %474 = memref.load %arg1[%c121] : memref<275xf32, #tpu.memory_space<smem>>
    %475 = vector.broadcast %474 : f32 to vector<8x128xf32>
    %476 = arith.addf %473, %475 : vector<8x128xf32>
    %477 = math.tanh %476 : vector<8x128xf32>
    %c122 = arith.constant 122 : index
    %478 = memref.load %arg1[%c122] : memref<275xf32, #tpu.memory_space<smem>>
    %479 = vector.broadcast %478 : f32 to vector<8x128xf32>
    %480 = arith.mulf %396, %479 : vector<8x128xf32>
    %c125 = arith.constant 125 : index
    %481 = memref.load %arg1[%c125] : memref<275xf32, #tpu.memory_space<smem>>
    %482 = vector.broadcast %481 : f32 to vector<8x128xf32>
    %483 = arith.mulf %423, %482 : vector<8x128xf32>
    %484 = arith.addf %480, %483 : vector<8x128xf32>
    %c128 = arith.constant 128 : index
    %485 = memref.load %arg1[%c128] : memref<275xf32, #tpu.memory_space<smem>>
    %486 = vector.broadcast %485 : f32 to vector<8x128xf32>
    %487 = arith.mulf %450, %486 : vector<8x128xf32>
    %488 = arith.addf %484, %487 : vector<8x128xf32>
    %c131 = arith.constant 131 : index
    %489 = memref.load %arg1[%c131] : memref<275xf32, #tpu.memory_space<smem>>
    %490 = vector.broadcast %489 : f32 to vector<8x128xf32>
    %491 = arith.mulf %477, %490 : vector<8x128xf32>
    %492 = arith.addf %488, %491 : vector<8x128xf32>
    %c134 = arith.constant 134 : index
    %493 = memref.load %arg1[%c134] : memref<275xf32, #tpu.memory_space<smem>>
    %494 = vector.broadcast %493 : f32 to vector<8x128xf32>
    %495 = arith.addf %492, %494 : vector<8x128xf32>
    %496 = math.tanh %495 : vector<8x128xf32>
    %c123 = arith.constant 123 : index
    %497 = memref.load %arg1[%c123] : memref<275xf32, #tpu.memory_space<smem>>
    %498 = vector.broadcast %497 : f32 to vector<8x128xf32>
    %499 = arith.mulf %396, %498 : vector<8x128xf32>
    %c126 = arith.constant 126 : index
    %500 = memref.load %arg1[%c126] : memref<275xf32, #tpu.memory_space<smem>>
    %501 = vector.broadcast %500 : f32 to vector<8x128xf32>
    %502 = arith.mulf %423, %501 : vector<8x128xf32>
    %503 = arith.addf %499, %502 : vector<8x128xf32>
    %c129 = arith.constant 129 : index
    %504 = memref.load %arg1[%c129] : memref<275xf32, #tpu.memory_space<smem>>
    %505 = vector.broadcast %504 : f32 to vector<8x128xf32>
    %506 = arith.mulf %450, %505 : vector<8x128xf32>
    %507 = arith.addf %503, %506 : vector<8x128xf32>
    %c132 = arith.constant 132 : index
    %508 = memref.load %arg1[%c132] : memref<275xf32, #tpu.memory_space<smem>>
    %509 = vector.broadcast %508 : f32 to vector<8x128xf32>
    %510 = arith.mulf %477, %509 : vector<8x128xf32>
    %511 = arith.addf %507, %510 : vector<8x128xf32>
    %c135 = arith.constant 135 : index
    %512 = memref.load %arg1[%c135] : memref<275xf32, #tpu.memory_space<smem>>
    %513 = vector.broadcast %512 : f32 to vector<8x128xf32>
    %514 = arith.addf %511, %513 : vector<8x128xf32>
    %515 = math.tanh %514 : vector<8x128xf32>
    %c124 = arith.constant 124 : index
    %516 = memref.load %arg1[%c124] : memref<275xf32, #tpu.memory_space<smem>>
    %517 = vector.broadcast %516 : f32 to vector<8x128xf32>
    %518 = arith.mulf %396, %517 : vector<8x128xf32>
    %c127 = arith.constant 127 : index
    %519 = memref.load %arg1[%c127] : memref<275xf32, #tpu.memory_space<smem>>
    %520 = vector.broadcast %519 : f32 to vector<8x128xf32>
    %521 = arith.mulf %423, %520 : vector<8x128xf32>
    %522 = arith.addf %518, %521 : vector<8x128xf32>
    %c130 = arith.constant 130 : index
    %523 = memref.load %arg1[%c130] : memref<275xf32, #tpu.memory_space<smem>>
    %524 = vector.broadcast %523 : f32 to vector<8x128xf32>
    %525 = arith.mulf %450, %524 : vector<8x128xf32>
    %526 = arith.addf %522, %525 : vector<8x128xf32>
    %c133 = arith.constant 133 : index
    %527 = memref.load %arg1[%c133] : memref<275xf32, #tpu.memory_space<smem>>
    %528 = vector.broadcast %527 : f32 to vector<8x128xf32>
    %529 = arith.mulf %477, %528 : vector<8x128xf32>
    %530 = arith.addf %526, %529 : vector<8x128xf32>
    %c136 = arith.constant 136 : index
    %531 = memref.load %arg1[%c136] : memref<275xf32, #tpu.memory_space<smem>>
    %532 = vector.broadcast %531 : f32 to vector<8x128xf32>
    %533 = arith.addf %530, %532 : vector<8x128xf32>
    %534 = math.tanh %533 : vector<8x128xf32>
    %c137 = arith.constant 137 : index
    %535 = memref.load %arg1[%c137] : memref<275xf32, #tpu.memory_space<smem>>
    %536 = vector.broadcast %535 : f32 to vector<8x128xf32>
    %537 = arith.mulf %496, %536 : vector<8x128xf32>
    %c141 = arith.constant 141 : index
    %538 = memref.load %arg1[%c141] : memref<275xf32, #tpu.memory_space<smem>>
    %539 = vector.broadcast %538 : f32 to vector<8x128xf32>
    %540 = arith.mulf %515, %539 : vector<8x128xf32>
    %541 = arith.addf %537, %540 : vector<8x128xf32>
    %c145 = arith.constant 145 : index
    %542 = memref.load %arg1[%c145] : memref<275xf32, #tpu.memory_space<smem>>
    %543 = vector.broadcast %542 : f32 to vector<8x128xf32>
    %544 = arith.mulf %534, %543 : vector<8x128xf32>
    %545 = arith.addf %541, %544 : vector<8x128xf32>
    %c149 = arith.constant 149 : index
    %546 = memref.load %arg1[%c149] : memref<275xf32, #tpu.memory_space<smem>>
    %547 = vector.broadcast %546 : f32 to vector<8x128xf32>
    %548 = arith.addf %545, %547 : vector<8x128xf32>
    %549 = math.tanh %548 : vector<8x128xf32>
    %c138 = arith.constant 138 : index
    %550 = memref.load %arg1[%c138] : memref<275xf32, #tpu.memory_space<smem>>
    %551 = vector.broadcast %550 : f32 to vector<8x128xf32>
    %552 = arith.mulf %496, %551 : vector<8x128xf32>
    %c142 = arith.constant 142 : index
    %553 = memref.load %arg1[%c142] : memref<275xf32, #tpu.memory_space<smem>>
    %554 = vector.broadcast %553 : f32 to vector<8x128xf32>
    %555 = arith.mulf %515, %554 : vector<8x128xf32>
    %556 = arith.addf %552, %555 : vector<8x128xf32>
    %c146 = arith.constant 146 : index
    %557 = memref.load %arg1[%c146] : memref<275xf32, #tpu.memory_space<smem>>
    %558 = vector.broadcast %557 : f32 to vector<8x128xf32>
    %559 = arith.mulf %534, %558 : vector<8x128xf32>
    %560 = arith.addf %556, %559 : vector<8x128xf32>
    %c150 = arith.constant 150 : index
    %561 = memref.load %arg1[%c150] : memref<275xf32, #tpu.memory_space<smem>>
    %562 = vector.broadcast %561 : f32 to vector<8x128xf32>
    %563 = arith.addf %560, %562 : vector<8x128xf32>
    %564 = math.tanh %563 : vector<8x128xf32>
    %c139 = arith.constant 139 : index
    %565 = memref.load %arg1[%c139] : memref<275xf32, #tpu.memory_space<smem>>
    %566 = vector.broadcast %565 : f32 to vector<8x128xf32>
    %567 = arith.mulf %496, %566 : vector<8x128xf32>
    %c143 = arith.constant 143 : index
    %568 = memref.load %arg1[%c143] : memref<275xf32, #tpu.memory_space<smem>>
    %569 = vector.broadcast %568 : f32 to vector<8x128xf32>
    %570 = arith.mulf %515, %569 : vector<8x128xf32>
    %571 = arith.addf %567, %570 : vector<8x128xf32>
    %c147 = arith.constant 147 : index
    %572 = memref.load %arg1[%c147] : memref<275xf32, #tpu.memory_space<smem>>
    %573 = vector.broadcast %572 : f32 to vector<8x128xf32>
    %574 = arith.mulf %534, %573 : vector<8x128xf32>
    %575 = arith.addf %571, %574 : vector<8x128xf32>
    %c151 = arith.constant 151 : index
    %576 = memref.load %arg1[%c151] : memref<275xf32, #tpu.memory_space<smem>>
    %577 = vector.broadcast %576 : f32 to vector<8x128xf32>
    %578 = arith.addf %575, %577 : vector<8x128xf32>
    %579 = math.tanh %578 : vector<8x128xf32>
    %c140 = arith.constant 140 : index
    %580 = memref.load %arg1[%c140] : memref<275xf32, #tpu.memory_space<smem>>
    %581 = vector.broadcast %580 : f32 to vector<8x128xf32>
    %582 = arith.mulf %496, %581 : vector<8x128xf32>
    %c144 = arith.constant 144 : index
    %583 = memref.load %arg1[%c144] : memref<275xf32, #tpu.memory_space<smem>>
    %584 = vector.broadcast %583 : f32 to vector<8x128xf32>
    %585 = arith.mulf %515, %584 : vector<8x128xf32>
    %586 = arith.addf %582, %585 : vector<8x128xf32>
    %c148 = arith.constant 148 : index
    %587 = memref.load %arg1[%c148] : memref<275xf32, #tpu.memory_space<smem>>
    %588 = vector.broadcast %587 : f32 to vector<8x128xf32>
    %589 = arith.mulf %534, %588 : vector<8x128xf32>
    %590 = arith.addf %586, %589 : vector<8x128xf32>
    %c152 = arith.constant 152 : index
    %591 = memref.load %arg1[%c152] : memref<275xf32, #tpu.memory_space<smem>>
    %592 = vector.broadcast %591 : f32 to vector<8x128xf32>
    %593 = arith.addf %590, %592 : vector<8x128xf32>
    %594 = math.tanh %593 : vector<8x128xf32>
    %c153 = arith.constant 153 : index
    %595 = memref.load %arg1[%c153] : memref<275xf32, #tpu.memory_space<smem>>
    %596 = vector.broadcast %595 : f32 to vector<8x128xf32>
    %597 = arith.mulf %549, %596 : vector<8x128xf32>
    %c159 = arith.constant 159 : index
    %598 = memref.load %arg1[%c159] : memref<275xf32, #tpu.memory_space<smem>>
    %599 = vector.broadcast %598 : f32 to vector<8x128xf32>
    %600 = arith.mulf %564, %599 : vector<8x128xf32>
    %601 = arith.addf %597, %600 : vector<8x128xf32>
    %c165 = arith.constant 165 : index
    %602 = memref.load %arg1[%c165] : memref<275xf32, #tpu.memory_space<smem>>
    %603 = vector.broadcast %602 : f32 to vector<8x128xf32>
    %604 = arith.mulf %579, %603 : vector<8x128xf32>
    %605 = arith.addf %601, %604 : vector<8x128xf32>
    %c171 = arith.constant 171 : index
    %606 = memref.load %arg1[%c171] : memref<275xf32, #tpu.memory_space<smem>>
    %607 = vector.broadcast %606 : f32 to vector<8x128xf32>
    %608 = arith.mulf %594, %607 : vector<8x128xf32>
    %609 = arith.addf %605, %608 : vector<8x128xf32>
    %c177 = arith.constant 177 : index
    %610 = memref.load %arg1[%c177] : memref<275xf32, #tpu.memory_space<smem>>
    %611 = vector.broadcast %610 : f32 to vector<8x128xf32>
    %612 = arith.addf %609, %611 : vector<8x128xf32>
    %613 = math.tanh %612 : vector<8x128xf32>
    %c154 = arith.constant 154 : index
    %614 = memref.load %arg1[%c154] : memref<275xf32, #tpu.memory_space<smem>>
    %615 = vector.broadcast %614 : f32 to vector<8x128xf32>
    %616 = arith.mulf %549, %615 : vector<8x128xf32>
    %c160 = arith.constant 160 : index
    %617 = memref.load %arg1[%c160] : memref<275xf32, #tpu.memory_space<smem>>
    %618 = vector.broadcast %617 : f32 to vector<8x128xf32>
    %619 = arith.mulf %564, %618 : vector<8x128xf32>
    %620 = arith.addf %616, %619 : vector<8x128xf32>
    %c166 = arith.constant 166 : index
    %621 = memref.load %arg1[%c166] : memref<275xf32, #tpu.memory_space<smem>>
    %622 = vector.broadcast %621 : f32 to vector<8x128xf32>
    %623 = arith.mulf %579, %622 : vector<8x128xf32>
    %624 = arith.addf %620, %623 : vector<8x128xf32>
    %c172 = arith.constant 172 : index
    %625 = memref.load %arg1[%c172] : memref<275xf32, #tpu.memory_space<smem>>
    %626 = vector.broadcast %625 : f32 to vector<8x128xf32>
    %627 = arith.mulf %594, %626 : vector<8x128xf32>
    %628 = arith.addf %624, %627 : vector<8x128xf32>
    %c178 = arith.constant 178 : index
    %629 = memref.load %arg1[%c178] : memref<275xf32, #tpu.memory_space<smem>>
    %630 = vector.broadcast %629 : f32 to vector<8x128xf32>
    %631 = arith.addf %628, %630 : vector<8x128xf32>
    %632 = math.tanh %631 : vector<8x128xf32>
    %c155 = arith.constant 155 : index
    %633 = memref.load %arg1[%c155] : memref<275xf32, #tpu.memory_space<smem>>
    %634 = vector.broadcast %633 : f32 to vector<8x128xf32>
    %635 = arith.mulf %549, %634 : vector<8x128xf32>
    %c161 = arith.constant 161 : index
    %636 = memref.load %arg1[%c161] : memref<275xf32, #tpu.memory_space<smem>>
    %637 = vector.broadcast %636 : f32 to vector<8x128xf32>
    %638 = arith.mulf %564, %637 : vector<8x128xf32>
    %639 = arith.addf %635, %638 : vector<8x128xf32>
    %c167 = arith.constant 167 : index
    %640 = memref.load %arg1[%c167] : memref<275xf32, #tpu.memory_space<smem>>
    %641 = vector.broadcast %640 : f32 to vector<8x128xf32>
    %642 = arith.mulf %579, %641 : vector<8x128xf32>
    %643 = arith.addf %639, %642 : vector<8x128xf32>
    %c173 = arith.constant 173 : index
    %644 = memref.load %arg1[%c173] : memref<275xf32, #tpu.memory_space<smem>>
    %645 = vector.broadcast %644 : f32 to vector<8x128xf32>
    %646 = arith.mulf %594, %645 : vector<8x128xf32>
    %647 = arith.addf %643, %646 : vector<8x128xf32>
    %c179 = arith.constant 179 : index
    %648 = memref.load %arg1[%c179] : memref<275xf32, #tpu.memory_space<smem>>
    %649 = vector.broadcast %648 : f32 to vector<8x128xf32>
    %650 = arith.addf %647, %649 : vector<8x128xf32>
    %651 = math.tanh %650 : vector<8x128xf32>
    %c156 = arith.constant 156 : index
    %652 = memref.load %arg1[%c156] : memref<275xf32, #tpu.memory_space<smem>>
    %653 = vector.broadcast %652 : f32 to vector<8x128xf32>
    %654 = arith.mulf %549, %653 : vector<8x128xf32>
    %c162 = arith.constant 162 : index
    %655 = memref.load %arg1[%c162] : memref<275xf32, #tpu.memory_space<smem>>
    %656 = vector.broadcast %655 : f32 to vector<8x128xf32>
    %657 = arith.mulf %564, %656 : vector<8x128xf32>
    %658 = arith.addf %654, %657 : vector<8x128xf32>
    %c168 = arith.constant 168 : index
    %659 = memref.load %arg1[%c168] : memref<275xf32, #tpu.memory_space<smem>>
    %660 = vector.broadcast %659 : f32 to vector<8x128xf32>
    %661 = arith.mulf %579, %660 : vector<8x128xf32>
    %662 = arith.addf %658, %661 : vector<8x128xf32>
    %c174 = arith.constant 174 : index
    %663 = memref.load %arg1[%c174] : memref<275xf32, #tpu.memory_space<smem>>
    %664 = vector.broadcast %663 : f32 to vector<8x128xf32>
    %665 = arith.mulf %594, %664 : vector<8x128xf32>
    %666 = arith.addf %662, %665 : vector<8x128xf32>
    %c180 = arith.constant 180 : index
    %667 = memref.load %arg1[%c180] : memref<275xf32, #tpu.memory_space<smem>>
    %668 = vector.broadcast %667 : f32 to vector<8x128xf32>
    %669 = arith.addf %666, %668 : vector<8x128xf32>
    %670 = math.tanh %669 : vector<8x128xf32>
    %c157 = arith.constant 157 : index
    %671 = memref.load %arg1[%c157] : memref<275xf32, #tpu.memory_space<smem>>
    %672 = vector.broadcast %671 : f32 to vector<8x128xf32>
    %673 = arith.mulf %549, %672 : vector<8x128xf32>
    %c163 = arith.constant 163 : index
    %674 = memref.load %arg1[%c163] : memref<275xf32, #tpu.memory_space<smem>>
    %675 = vector.broadcast %674 : f32 to vector<8x128xf32>
    %676 = arith.mulf %564, %675 : vector<8x128xf32>
    %677 = arith.addf %673, %676 : vector<8x128xf32>
    %c169 = arith.constant 169 : index
    %678 = memref.load %arg1[%c169] : memref<275xf32, #tpu.memory_space<smem>>
    %679 = vector.broadcast %678 : f32 to vector<8x128xf32>
    %680 = arith.mulf %579, %679 : vector<8x128xf32>
    %681 = arith.addf %677, %680 : vector<8x128xf32>
    %c175 = arith.constant 175 : index
    %682 = memref.load %arg1[%c175] : memref<275xf32, #tpu.memory_space<smem>>
    %683 = vector.broadcast %682 : f32 to vector<8x128xf32>
    %684 = arith.mulf %594, %683 : vector<8x128xf32>
    %685 = arith.addf %681, %684 : vector<8x128xf32>
    %c181 = arith.constant 181 : index
    %686 = memref.load %arg1[%c181] : memref<275xf32, #tpu.memory_space<smem>>
    %687 = vector.broadcast %686 : f32 to vector<8x128xf32>
    %688 = arith.addf %685, %687 : vector<8x128xf32>
    %689 = math.tanh %688 : vector<8x128xf32>
    %c158 = arith.constant 158 : index
    %690 = memref.load %arg1[%c158] : memref<275xf32, #tpu.memory_space<smem>>
    %691 = vector.broadcast %690 : f32 to vector<8x128xf32>
    %692 = arith.mulf %549, %691 : vector<8x128xf32>
    %c164 = arith.constant 164 : index
    %693 = memref.load %arg1[%c164] : memref<275xf32, #tpu.memory_space<smem>>
    %694 = vector.broadcast %693 : f32 to vector<8x128xf32>
    %695 = arith.mulf %564, %694 : vector<8x128xf32>
    %696 = arith.addf %692, %695 : vector<8x128xf32>
    %c170 = arith.constant 170 : index
    %697 = memref.load %arg1[%c170] : memref<275xf32, #tpu.memory_space<smem>>
    %698 = vector.broadcast %697 : f32 to vector<8x128xf32>
    %699 = arith.mulf %579, %698 : vector<8x128xf32>
    %700 = arith.addf %696, %699 : vector<8x128xf32>
    %c176 = arith.constant 176 : index
    %701 = memref.load %arg1[%c176] : memref<275xf32, #tpu.memory_space<smem>>
    %702 = vector.broadcast %701 : f32 to vector<8x128xf32>
    %703 = arith.mulf %594, %702 : vector<8x128xf32>
    %704 = arith.addf %700, %703 : vector<8x128xf32>
    %c182 = arith.constant 182 : index
    %705 = memref.load %arg1[%c182] : memref<275xf32, #tpu.memory_space<smem>>
    %706 = vector.broadcast %705 : f32 to vector<8x128xf32>
    %707 = arith.addf %704, %706 : vector<8x128xf32>
    %708 = math.tanh %707 : vector<8x128xf32>
    %c183 = arith.constant 183 : index
    %709 = memref.load %arg1[%c183] : memref<275xf32, #tpu.memory_space<smem>>
    %710 = vector.broadcast %709 : f32 to vector<8x128xf32>
    %711 = arith.mulf %613, %710 : vector<8x128xf32>
    %c191 = arith.constant 191 : index
    %712 = memref.load %arg1[%c191] : memref<275xf32, #tpu.memory_space<smem>>
    %713 = vector.broadcast %712 : f32 to vector<8x128xf32>
    %714 = arith.mulf %632, %713 : vector<8x128xf32>
    %715 = arith.addf %711, %714 : vector<8x128xf32>
    %c199 = arith.constant 199 : index
    %716 = memref.load %arg1[%c199] : memref<275xf32, #tpu.memory_space<smem>>
    %717 = vector.broadcast %716 : f32 to vector<8x128xf32>
    %718 = arith.mulf %651, %717 : vector<8x128xf32>
    %719 = arith.addf %715, %718 : vector<8x128xf32>
    %c207 = arith.constant 207 : index
    %720 = memref.load %arg1[%c207] : memref<275xf32, #tpu.memory_space<smem>>
    %721 = vector.broadcast %720 : f32 to vector<8x128xf32>
    %722 = arith.mulf %670, %721 : vector<8x128xf32>
    %723 = arith.addf %719, %722 : vector<8x128xf32>
    %c215 = arith.constant 215 : index
    %724 = memref.load %arg1[%c215] : memref<275xf32, #tpu.memory_space<smem>>
    %725 = vector.broadcast %724 : f32 to vector<8x128xf32>
    %726 = arith.mulf %689, %725 : vector<8x128xf32>
    %727 = arith.addf %723, %726 : vector<8x128xf32>
    %c223 = arith.constant 223 : index
    %728 = memref.load %arg1[%c223] : memref<275xf32, #tpu.memory_space<smem>>
    %729 = vector.broadcast %728 : f32 to vector<8x128xf32>
    %730 = arith.mulf %708, %729 : vector<8x128xf32>
    %731 = arith.addf %727, %730 : vector<8x128xf32>
    %c231 = arith.constant 231 : index
    %732 = memref.load %arg1[%c231] : memref<275xf32, #tpu.memory_space<smem>>
    %733 = vector.broadcast %732 : f32 to vector<8x128xf32>
    %734 = arith.addf %731, %733 : vector<8x128xf32>
    %735 = math.tanh %734 : vector<8x128xf32>
    %c184 = arith.constant 184 : index
    %736 = memref.load %arg1[%c184] : memref<275xf32, #tpu.memory_space<smem>>
    %737 = vector.broadcast %736 : f32 to vector<8x128xf32>
    %738 = arith.mulf %613, %737 : vector<8x128xf32>
    %c192 = arith.constant 192 : index
    %739 = memref.load %arg1[%c192] : memref<275xf32, #tpu.memory_space<smem>>
    %740 = vector.broadcast %739 : f32 to vector<8x128xf32>
    %741 = arith.mulf %632, %740 : vector<8x128xf32>
    %742 = arith.addf %738, %741 : vector<8x128xf32>
    %c200 = arith.constant 200 : index
    %743 = memref.load %arg1[%c200] : memref<275xf32, #tpu.memory_space<smem>>
    %744 = vector.broadcast %743 : f32 to vector<8x128xf32>
    %745 = arith.mulf %651, %744 : vector<8x128xf32>
    %746 = arith.addf %742, %745 : vector<8x128xf32>
    %c208 = arith.constant 208 : index
    %747 = memref.load %arg1[%c208] : memref<275xf32, #tpu.memory_space<smem>>
    %748 = vector.broadcast %747 : f32 to vector<8x128xf32>
    %749 = arith.mulf %670, %748 : vector<8x128xf32>
    %750 = arith.addf %746, %749 : vector<8x128xf32>
    %c216 = arith.constant 216 : index
    %751 = memref.load %arg1[%c216] : memref<275xf32, #tpu.memory_space<smem>>
    %752 = vector.broadcast %751 : f32 to vector<8x128xf32>
    %753 = arith.mulf %689, %752 : vector<8x128xf32>
    %754 = arith.addf %750, %753 : vector<8x128xf32>
    %c224 = arith.constant 224 : index
    %755 = memref.load %arg1[%c224] : memref<275xf32, #tpu.memory_space<smem>>
    %756 = vector.broadcast %755 : f32 to vector<8x128xf32>
    %757 = arith.mulf %708, %756 : vector<8x128xf32>
    %758 = arith.addf %754, %757 : vector<8x128xf32>
    %c232 = arith.constant 232 : index
    %759 = memref.load %arg1[%c232] : memref<275xf32, #tpu.memory_space<smem>>
    %760 = vector.broadcast %759 : f32 to vector<8x128xf32>
    %761 = arith.addf %758, %760 : vector<8x128xf32>
    %762 = math.tanh %761 : vector<8x128xf32>
    %c185 = arith.constant 185 : index
    %763 = memref.load %arg1[%c185] : memref<275xf32, #tpu.memory_space<smem>>
    %764 = vector.broadcast %763 : f32 to vector<8x128xf32>
    %765 = arith.mulf %613, %764 : vector<8x128xf32>
    %c193 = arith.constant 193 : index
    %766 = memref.load %arg1[%c193] : memref<275xf32, #tpu.memory_space<smem>>
    %767 = vector.broadcast %766 : f32 to vector<8x128xf32>
    %768 = arith.mulf %632, %767 : vector<8x128xf32>
    %769 = arith.addf %765, %768 : vector<8x128xf32>
    %c201 = arith.constant 201 : index
    %770 = memref.load %arg1[%c201] : memref<275xf32, #tpu.memory_space<smem>>
    %771 = vector.broadcast %770 : f32 to vector<8x128xf32>
    %772 = arith.mulf %651, %771 : vector<8x128xf32>
    %773 = arith.addf %769, %772 : vector<8x128xf32>
    %c209 = arith.constant 209 : index
    %774 = memref.load %arg1[%c209] : memref<275xf32, #tpu.memory_space<smem>>
    %775 = vector.broadcast %774 : f32 to vector<8x128xf32>
    %776 = arith.mulf %670, %775 : vector<8x128xf32>
    %777 = arith.addf %773, %776 : vector<8x128xf32>
    %c217 = arith.constant 217 : index
    %778 = memref.load %arg1[%c217] : memref<275xf32, #tpu.memory_space<smem>>
    %779 = vector.broadcast %778 : f32 to vector<8x128xf32>
    %780 = arith.mulf %689, %779 : vector<8x128xf32>
    %781 = arith.addf %777, %780 : vector<8x128xf32>
    %c225 = arith.constant 225 : index
    %782 = memref.load %arg1[%c225] : memref<275xf32, #tpu.memory_space<smem>>
    %783 = vector.broadcast %782 : f32 to vector<8x128xf32>
    %784 = arith.mulf %708, %783 : vector<8x128xf32>
    %785 = arith.addf %781, %784 : vector<8x128xf32>
    %c233 = arith.constant 233 : index
    %786 = memref.load %arg1[%c233] : memref<275xf32, #tpu.memory_space<smem>>
    %787 = vector.broadcast %786 : f32 to vector<8x128xf32>
    %788 = arith.addf %785, %787 : vector<8x128xf32>
    %789 = math.tanh %788 : vector<8x128xf32>
    %c186 = arith.constant 186 : index
    %790 = memref.load %arg1[%c186] : memref<275xf32, #tpu.memory_space<smem>>
    %791 = vector.broadcast %790 : f32 to vector<8x128xf32>
    %792 = arith.mulf %613, %791 : vector<8x128xf32>
    %c194 = arith.constant 194 : index
    %793 = memref.load %arg1[%c194] : memref<275xf32, #tpu.memory_space<smem>>
    %794 = vector.broadcast %793 : f32 to vector<8x128xf32>
    %795 = arith.mulf %632, %794 : vector<8x128xf32>
    %796 = arith.addf %792, %795 : vector<8x128xf32>
    %c202 = arith.constant 202 : index
    %797 = memref.load %arg1[%c202] : memref<275xf32, #tpu.memory_space<smem>>
    %798 = vector.broadcast %797 : f32 to vector<8x128xf32>
    %799 = arith.mulf %651, %798 : vector<8x128xf32>
    %800 = arith.addf %796, %799 : vector<8x128xf32>
    %c210 = arith.constant 210 : index
    %801 = memref.load %arg1[%c210] : memref<275xf32, #tpu.memory_space<smem>>
    %802 = vector.broadcast %801 : f32 to vector<8x128xf32>
    %803 = arith.mulf %670, %802 : vector<8x128xf32>
    %804 = arith.addf %800, %803 : vector<8x128xf32>
    %c218 = arith.constant 218 : index
    %805 = memref.load %arg1[%c218] : memref<275xf32, #tpu.memory_space<smem>>
    %806 = vector.broadcast %805 : f32 to vector<8x128xf32>
    %807 = arith.mulf %689, %806 : vector<8x128xf32>
    %808 = arith.addf %804, %807 : vector<8x128xf32>
    %c226 = arith.constant 226 : index
    %809 = memref.load %arg1[%c226] : memref<275xf32, #tpu.memory_space<smem>>
    %810 = vector.broadcast %809 : f32 to vector<8x128xf32>
    %811 = arith.mulf %708, %810 : vector<8x128xf32>
    %812 = arith.addf %808, %811 : vector<8x128xf32>
    %c234 = arith.constant 234 : index
    %813 = memref.load %arg1[%c234] : memref<275xf32, #tpu.memory_space<smem>>
    %814 = vector.broadcast %813 : f32 to vector<8x128xf32>
    %815 = arith.addf %812, %814 : vector<8x128xf32>
    %816 = math.tanh %815 : vector<8x128xf32>
    %c187 = arith.constant 187 : index
    %817 = memref.load %arg1[%c187] : memref<275xf32, #tpu.memory_space<smem>>
    %818 = vector.broadcast %817 : f32 to vector<8x128xf32>
    %819 = arith.mulf %613, %818 : vector<8x128xf32>
    %c195 = arith.constant 195 : index
    %820 = memref.load %arg1[%c195] : memref<275xf32, #tpu.memory_space<smem>>
    %821 = vector.broadcast %820 : f32 to vector<8x128xf32>
    %822 = arith.mulf %632, %821 : vector<8x128xf32>
    %823 = arith.addf %819, %822 : vector<8x128xf32>
    %c203 = arith.constant 203 : index
    %824 = memref.load %arg1[%c203] : memref<275xf32, #tpu.memory_space<smem>>
    %825 = vector.broadcast %824 : f32 to vector<8x128xf32>
    %826 = arith.mulf %651, %825 : vector<8x128xf32>
    %827 = arith.addf %823, %826 : vector<8x128xf32>
    %c211 = arith.constant 211 : index
    %828 = memref.load %arg1[%c211] : memref<275xf32, #tpu.memory_space<smem>>
    %829 = vector.broadcast %828 : f32 to vector<8x128xf32>
    %830 = arith.mulf %670, %829 : vector<8x128xf32>
    %831 = arith.addf %827, %830 : vector<8x128xf32>
    %c219 = arith.constant 219 : index
    %832 = memref.load %arg1[%c219] : memref<275xf32, #tpu.memory_space<smem>>
    %833 = vector.broadcast %832 : f32 to vector<8x128xf32>
    %834 = arith.mulf %689, %833 : vector<8x128xf32>
    %835 = arith.addf %831, %834 : vector<8x128xf32>
    %c227 = arith.constant 227 : index
    %836 = memref.load %arg1[%c227] : memref<275xf32, #tpu.memory_space<smem>>
    %837 = vector.broadcast %836 : f32 to vector<8x128xf32>
    %838 = arith.mulf %708, %837 : vector<8x128xf32>
    %839 = arith.addf %835, %838 : vector<8x128xf32>
    %c235 = arith.constant 235 : index
    %840 = memref.load %arg1[%c235] : memref<275xf32, #tpu.memory_space<smem>>
    %841 = vector.broadcast %840 : f32 to vector<8x128xf32>
    %842 = arith.addf %839, %841 : vector<8x128xf32>
    %843 = math.tanh %842 : vector<8x128xf32>
    %c188 = arith.constant 188 : index
    %844 = memref.load %arg1[%c188] : memref<275xf32, #tpu.memory_space<smem>>
    %845 = vector.broadcast %844 : f32 to vector<8x128xf32>
    %846 = arith.mulf %613, %845 : vector<8x128xf32>
    %c196 = arith.constant 196 : index
    %847 = memref.load %arg1[%c196] : memref<275xf32, #tpu.memory_space<smem>>
    %848 = vector.broadcast %847 : f32 to vector<8x128xf32>
    %849 = arith.mulf %632, %848 : vector<8x128xf32>
    %850 = arith.addf %846, %849 : vector<8x128xf32>
    %c204 = arith.constant 204 : index
    %851 = memref.load %arg1[%c204] : memref<275xf32, #tpu.memory_space<smem>>
    %852 = vector.broadcast %851 : f32 to vector<8x128xf32>
    %853 = arith.mulf %651, %852 : vector<8x128xf32>
    %854 = arith.addf %850, %853 : vector<8x128xf32>
    %c212 = arith.constant 212 : index
    %855 = memref.load %arg1[%c212] : memref<275xf32, #tpu.memory_space<smem>>
    %856 = vector.broadcast %855 : f32 to vector<8x128xf32>
    %857 = arith.mulf %670, %856 : vector<8x128xf32>
    %858 = arith.addf %854, %857 : vector<8x128xf32>
    %c220 = arith.constant 220 : index
    %859 = memref.load %arg1[%c220] : memref<275xf32, #tpu.memory_space<smem>>
    %860 = vector.broadcast %859 : f32 to vector<8x128xf32>
    %861 = arith.mulf %689, %860 : vector<8x128xf32>
    %862 = arith.addf %858, %861 : vector<8x128xf32>
    %c228 = arith.constant 228 : index
    %863 = memref.load %arg1[%c228] : memref<275xf32, #tpu.memory_space<smem>>
    %864 = vector.broadcast %863 : f32 to vector<8x128xf32>
    %865 = arith.mulf %708, %864 : vector<8x128xf32>
    %866 = arith.addf %862, %865 : vector<8x128xf32>
    %c236 = arith.constant 236 : index
    %867 = memref.load %arg1[%c236] : memref<275xf32, #tpu.memory_space<smem>>
    %868 = vector.broadcast %867 : f32 to vector<8x128xf32>
    %869 = arith.addf %866, %868 : vector<8x128xf32>
    %870 = math.tanh %869 : vector<8x128xf32>
    %c189 = arith.constant 189 : index
    %871 = memref.load %arg1[%c189] : memref<275xf32, #tpu.memory_space<smem>>
    %872 = vector.broadcast %871 : f32 to vector<8x128xf32>
    %873 = arith.mulf %613, %872 : vector<8x128xf32>
    %c197 = arith.constant 197 : index
    %874 = memref.load %arg1[%c197] : memref<275xf32, #tpu.memory_space<smem>>
    %875 = vector.broadcast %874 : f32 to vector<8x128xf32>
    %876 = arith.mulf %632, %875 : vector<8x128xf32>
    %877 = arith.addf %873, %876 : vector<8x128xf32>
    %c205 = arith.constant 205 : index
    %878 = memref.load %arg1[%c205] : memref<275xf32, #tpu.memory_space<smem>>
    %879 = vector.broadcast %878 : f32 to vector<8x128xf32>
    %880 = arith.mulf %651, %879 : vector<8x128xf32>
    %881 = arith.addf %877, %880 : vector<8x128xf32>
    %c213 = arith.constant 213 : index
    %882 = memref.load %arg1[%c213] : memref<275xf32, #tpu.memory_space<smem>>
    %883 = vector.broadcast %882 : f32 to vector<8x128xf32>
    %884 = arith.mulf %670, %883 : vector<8x128xf32>
    %885 = arith.addf %881, %884 : vector<8x128xf32>
    %c221 = arith.constant 221 : index
    %886 = memref.load %arg1[%c221] : memref<275xf32, #tpu.memory_space<smem>>
    %887 = vector.broadcast %886 : f32 to vector<8x128xf32>
    %888 = arith.mulf %689, %887 : vector<8x128xf32>
    %889 = arith.addf %885, %888 : vector<8x128xf32>
    %c229 = arith.constant 229 : index
    %890 = memref.load %arg1[%c229] : memref<275xf32, #tpu.memory_space<smem>>
    %891 = vector.broadcast %890 : f32 to vector<8x128xf32>
    %892 = arith.mulf %708, %891 : vector<8x128xf32>
    %893 = arith.addf %889, %892 : vector<8x128xf32>
    %c237 = arith.constant 237 : index
    %894 = memref.load %arg1[%c237] : memref<275xf32, #tpu.memory_space<smem>>
    %895 = vector.broadcast %894 : f32 to vector<8x128xf32>
    %896 = arith.addf %893, %895 : vector<8x128xf32>
    %897 = math.tanh %896 : vector<8x128xf32>
    %c190 = arith.constant 190 : index
    %898 = memref.load %arg1[%c190] : memref<275xf32, #tpu.memory_space<smem>>
    %899 = vector.broadcast %898 : f32 to vector<8x128xf32>
    %900 = arith.mulf %613, %899 : vector<8x128xf32>
    %c198 = arith.constant 198 : index
    %901 = memref.load %arg1[%c198] : memref<275xf32, #tpu.memory_space<smem>>
    %902 = vector.broadcast %901 : f32 to vector<8x128xf32>
    %903 = arith.mulf %632, %902 : vector<8x128xf32>
    %904 = arith.addf %900, %903 : vector<8x128xf32>
    %c206 = arith.constant 206 : index
    %905 = memref.load %arg1[%c206] : memref<275xf32, #tpu.memory_space<smem>>
    %906 = vector.broadcast %905 : f32 to vector<8x128xf32>
    %907 = arith.mulf %651, %906 : vector<8x128xf32>
    %908 = arith.addf %904, %907 : vector<8x128xf32>
    %c214 = arith.constant 214 : index
    %909 = memref.load %arg1[%c214] : memref<275xf32, #tpu.memory_space<smem>>
    %910 = vector.broadcast %909 : f32 to vector<8x128xf32>
    %911 = arith.mulf %670, %910 : vector<8x128xf32>
    %912 = arith.addf %908, %911 : vector<8x128xf32>
    %c222 = arith.constant 222 : index
    %913 = memref.load %arg1[%c222] : memref<275xf32, #tpu.memory_space<smem>>
    %914 = vector.broadcast %913 : f32 to vector<8x128xf32>
    %915 = arith.mulf %689, %914 : vector<8x128xf32>
    %916 = arith.addf %912, %915 : vector<8x128xf32>
    %c230 = arith.constant 230 : index
    %917 = memref.load %arg1[%c230] : memref<275xf32, #tpu.memory_space<smem>>
    %918 = vector.broadcast %917 : f32 to vector<8x128xf32>
    %919 = arith.mulf %708, %918 : vector<8x128xf32>
    %920 = arith.addf %916, %919 : vector<8x128xf32>
    %c238 = arith.constant 238 : index
    %921 = memref.load %arg1[%c238] : memref<275xf32, #tpu.memory_space<smem>>
    %922 = vector.broadcast %921 : f32 to vector<8x128xf32>
    %923 = arith.addf %920, %922 : vector<8x128xf32>
    %924 = math.tanh %923 : vector<8x128xf32>
    %c239 = arith.constant 239 : index
    %925 = memref.load %arg1[%c239] : memref<275xf32, #tpu.memory_space<smem>>
    %926 = vector.broadcast %925 : f32 to vector<8x128xf32>
    %927 = arith.mulf %735, %926 : vector<8x128xf32>
    %c243 = arith.constant 243 : index
    %928 = memref.load %arg1[%c243] : memref<275xf32, #tpu.memory_space<smem>>
    %929 = vector.broadcast %928 : f32 to vector<8x128xf32>
    %930 = arith.mulf %762, %929 : vector<8x128xf32>
    %931 = arith.addf %927, %930 : vector<8x128xf32>
    %c247 = arith.constant 247 : index
    %932 = memref.load %arg1[%c247] : memref<275xf32, #tpu.memory_space<smem>>
    %933 = vector.broadcast %932 : f32 to vector<8x128xf32>
    %934 = arith.mulf %789, %933 : vector<8x128xf32>
    %935 = arith.addf %931, %934 : vector<8x128xf32>
    %c251 = arith.constant 251 : index
    %936 = memref.load %arg1[%c251] : memref<275xf32, #tpu.memory_space<smem>>
    %937 = vector.broadcast %936 : f32 to vector<8x128xf32>
    %938 = arith.mulf %816, %937 : vector<8x128xf32>
    %939 = arith.addf %935, %938 : vector<8x128xf32>
    %c255 = arith.constant 255 : index
    %940 = memref.load %arg1[%c255] : memref<275xf32, #tpu.memory_space<smem>>
    %941 = vector.broadcast %940 : f32 to vector<8x128xf32>
    %942 = arith.mulf %843, %941 : vector<8x128xf32>
    %943 = arith.addf %939, %942 : vector<8x128xf32>
    %c259 = arith.constant 259 : index
    %944 = memref.load %arg1[%c259] : memref<275xf32, #tpu.memory_space<smem>>
    %945 = vector.broadcast %944 : f32 to vector<8x128xf32>
    %946 = arith.mulf %870, %945 : vector<8x128xf32>
    %947 = arith.addf %943, %946 : vector<8x128xf32>
    %c263 = arith.constant 263 : index
    %948 = memref.load %arg1[%c263] : memref<275xf32, #tpu.memory_space<smem>>
    %949 = vector.broadcast %948 : f32 to vector<8x128xf32>
    %950 = arith.mulf %897, %949 : vector<8x128xf32>
    %951 = arith.addf %947, %950 : vector<8x128xf32>
    %c267 = arith.constant 267 : index
    %952 = memref.load %arg1[%c267] : memref<275xf32, #tpu.memory_space<smem>>
    %953 = vector.broadcast %952 : f32 to vector<8x128xf32>
    %954 = arith.mulf %924, %953 : vector<8x128xf32>
    %955 = arith.addf %951, %954 : vector<8x128xf32>
    %c271 = arith.constant 271 : index
    %956 = memref.load %arg1[%c271] : memref<275xf32, #tpu.memory_space<smem>>
    %957 = vector.broadcast %956 : f32 to vector<8x128xf32>
    %958 = arith.addf %955, %957 : vector<8x128xf32>
    %c240 = arith.constant 240 : index
    %959 = memref.load %arg1[%c240] : memref<275xf32, #tpu.memory_space<smem>>
    %960 = vector.broadcast %959 : f32 to vector<8x128xf32>
    %961 = arith.mulf %735, %960 : vector<8x128xf32>
    %c244 = arith.constant 244 : index
    %962 = memref.load %arg1[%c244] : memref<275xf32, #tpu.memory_space<smem>>
    %963 = vector.broadcast %962 : f32 to vector<8x128xf32>
    %964 = arith.mulf %762, %963 : vector<8x128xf32>
    %965 = arith.addf %961, %964 : vector<8x128xf32>
    %c248 = arith.constant 248 : index
    %966 = memref.load %arg1[%c248] : memref<275xf32, #tpu.memory_space<smem>>
    %967 = vector.broadcast %966 : f32 to vector<8x128xf32>
    %968 = arith.mulf %789, %967 : vector<8x128xf32>
    %969 = arith.addf %965, %968 : vector<8x128xf32>
    %c252 = arith.constant 252 : index
    %970 = memref.load %arg1[%c252] : memref<275xf32, #tpu.memory_space<smem>>
    %971 = vector.broadcast %970 : f32 to vector<8x128xf32>
    %972 = arith.mulf %816, %971 : vector<8x128xf32>
    %973 = arith.addf %969, %972 : vector<8x128xf32>
    %c256 = arith.constant 256 : index
    %974 = memref.load %arg1[%c256] : memref<275xf32, #tpu.memory_space<smem>>
    %975 = vector.broadcast %974 : f32 to vector<8x128xf32>
    %976 = arith.mulf %843, %975 : vector<8x128xf32>
    %977 = arith.addf %973, %976 : vector<8x128xf32>
    %c260 = arith.constant 260 : index
    %978 = memref.load %arg1[%c260] : memref<275xf32, #tpu.memory_space<smem>>
    %979 = vector.broadcast %978 : f32 to vector<8x128xf32>
    %980 = arith.mulf %870, %979 : vector<8x128xf32>
    %981 = arith.addf %977, %980 : vector<8x128xf32>
    %c264 = arith.constant 264 : index
    %982 = memref.load %arg1[%c264] : memref<275xf32, #tpu.memory_space<smem>>
    %983 = vector.broadcast %982 : f32 to vector<8x128xf32>
    %984 = arith.mulf %897, %983 : vector<8x128xf32>
    %985 = arith.addf %981, %984 : vector<8x128xf32>
    %c268 = arith.constant 268 : index
    %986 = memref.load %arg1[%c268] : memref<275xf32, #tpu.memory_space<smem>>
    %987 = vector.broadcast %986 : f32 to vector<8x128xf32>
    %988 = arith.mulf %924, %987 : vector<8x128xf32>
    %989 = arith.addf %985, %988 : vector<8x128xf32>
    %c272 = arith.constant 272 : index
    %990 = memref.load %arg1[%c272] : memref<275xf32, #tpu.memory_space<smem>>
    %991 = vector.broadcast %990 : f32 to vector<8x128xf32>
    %992 = arith.addf %989, %991 : vector<8x128xf32>
    %c241 = arith.constant 241 : index
    %993 = memref.load %arg1[%c241] : memref<275xf32, #tpu.memory_space<smem>>
    %994 = vector.broadcast %993 : f32 to vector<8x128xf32>
    %995 = arith.mulf %735, %994 : vector<8x128xf32>
    %c245 = arith.constant 245 : index
    %996 = memref.load %arg1[%c245] : memref<275xf32, #tpu.memory_space<smem>>
    %997 = vector.broadcast %996 : f32 to vector<8x128xf32>
    %998 = arith.mulf %762, %997 : vector<8x128xf32>
    %999 = arith.addf %995, %998 : vector<8x128xf32>
    %c249 = arith.constant 249 : index
    %1000 = memref.load %arg1[%c249] : memref<275xf32, #tpu.memory_space<smem>>
    %1001 = vector.broadcast %1000 : f32 to vector<8x128xf32>
    %1002 = arith.mulf %789, %1001 : vector<8x128xf32>
    %1003 = arith.addf %999, %1002 : vector<8x128xf32>
    %c253 = arith.constant 253 : index
    %1004 = memref.load %arg1[%c253] : memref<275xf32, #tpu.memory_space<smem>>
    %1005 = vector.broadcast %1004 : f32 to vector<8x128xf32>
    %1006 = arith.mulf %816, %1005 : vector<8x128xf32>
    %1007 = arith.addf %1003, %1006 : vector<8x128xf32>
    %c257 = arith.constant 257 : index
    %1008 = memref.load %arg1[%c257] : memref<275xf32, #tpu.memory_space<smem>>
    %1009 = vector.broadcast %1008 : f32 to vector<8x128xf32>
    %1010 = arith.mulf %843, %1009 : vector<8x128xf32>
    %1011 = arith.addf %1007, %1010 : vector<8x128xf32>
    %c261 = arith.constant 261 : index
    %1012 = memref.load %arg1[%c261] : memref<275xf32, #tpu.memory_space<smem>>
    %1013 = vector.broadcast %1012 : f32 to vector<8x128xf32>
    %1014 = arith.mulf %870, %1013 : vector<8x128xf32>
    %1015 = arith.addf %1011, %1014 : vector<8x128xf32>
    %c265 = arith.constant 265 : index
    %1016 = memref.load %arg1[%c265] : memref<275xf32, #tpu.memory_space<smem>>
    %1017 = vector.broadcast %1016 : f32 to vector<8x128xf32>
    %1018 = arith.mulf %897, %1017 : vector<8x128xf32>
    %1019 = arith.addf %1015, %1018 : vector<8x128xf32>
    %c269 = arith.constant 269 : index
    %1020 = memref.load %arg1[%c269] : memref<275xf32, #tpu.memory_space<smem>>
    %1021 = vector.broadcast %1020 : f32 to vector<8x128xf32>
    %1022 = arith.mulf %924, %1021 : vector<8x128xf32>
    %1023 = arith.addf %1019, %1022 : vector<8x128xf32>
    %c273 = arith.constant 273 : index
    %1024 = memref.load %arg1[%c273] : memref<275xf32, #tpu.memory_space<smem>>
    %1025 = vector.broadcast %1024 : f32 to vector<8x128xf32>
    %1026 = arith.addf %1023, %1025 : vector<8x128xf32>
    %c242 = arith.constant 242 : index
    %1027 = memref.load %arg1[%c242] : memref<275xf32, #tpu.memory_space<smem>>
    %1028 = vector.broadcast %1027 : f32 to vector<8x128xf32>
    %1029 = arith.mulf %735, %1028 : vector<8x128xf32>
    %c246 = arith.constant 246 : index
    %1030 = memref.load %arg1[%c246] : memref<275xf32, #tpu.memory_space<smem>>
    %1031 = vector.broadcast %1030 : f32 to vector<8x128xf32>
    %1032 = arith.mulf %762, %1031 : vector<8x128xf32>
    %1033 = arith.addf %1029, %1032 : vector<8x128xf32>
    %c250 = arith.constant 250 : index
    %1034 = memref.load %arg1[%c250] : memref<275xf32, #tpu.memory_space<smem>>
    %1035 = vector.broadcast %1034 : f32 to vector<8x128xf32>
    %1036 = arith.mulf %789, %1035 : vector<8x128xf32>
    %1037 = arith.addf %1033, %1036 : vector<8x128xf32>
    %c254 = arith.constant 254 : index
    %1038 = memref.load %arg1[%c254] : memref<275xf32, #tpu.memory_space<smem>>
    %1039 = vector.broadcast %1038 : f32 to vector<8x128xf32>
    %1040 = arith.mulf %816, %1039 : vector<8x128xf32>
    %1041 = arith.addf %1037, %1040 : vector<8x128xf32>
    %c258 = arith.constant 258 : index
    %1042 = memref.load %arg1[%c258] : memref<275xf32, #tpu.memory_space<smem>>
    %1043 = vector.broadcast %1042 : f32 to vector<8x128xf32>
    %1044 = arith.mulf %843, %1043 : vector<8x128xf32>
    %1045 = arith.addf %1041, %1044 : vector<8x128xf32>
    %c262 = arith.constant 262 : index
    %1046 = memref.load %arg1[%c262] : memref<275xf32, #tpu.memory_space<smem>>
    %1047 = vector.broadcast %1046 : f32 to vector<8x128xf32>
    %1048 = arith.mulf %870, %1047 : vector<8x128xf32>
    %1049 = arith.addf %1045, %1048 : vector<8x128xf32>
    %c266 = arith.constant 266 : index
    %1050 = memref.load %arg1[%c266] : memref<275xf32, #tpu.memory_space<smem>>
    %1051 = vector.broadcast %1050 : f32 to vector<8x128xf32>
    %1052 = arith.mulf %897, %1051 : vector<8x128xf32>
    %1053 = arith.addf %1049, %1052 : vector<8x128xf32>
    %c270 = arith.constant 270 : index
    %1054 = memref.load %arg1[%c270] : memref<275xf32, #tpu.memory_space<smem>>
    %1055 = vector.broadcast %1054 : f32 to vector<8x128xf32>
    %1056 = arith.mulf %924, %1055 : vector<8x128xf32>
    %1057 = arith.addf %1053, %1056 : vector<8x128xf32>
    %c274 = arith.constant 274 : index
    %1058 = memref.load %arg1[%c274] : memref<275xf32, #tpu.memory_space<smem>>
    %1059 = vector.broadcast %1058 : f32 to vector<8x128xf32>
    %1060 = arith.addf %1057, %1059 : vector<8x128xf32>
    %c0_12 = arith.constant 0 : index
    %c0_13 = arith.constant 0 : index
    %c0_14 = arith.constant 0 : index
    %1061 = vector.load %arg3[%c0_12, %c0_13, %c0_14] : memref<4x8x128xf32, #tpu.memory_space<vmem>>, vector<1x8x128xf32>
    %1062 = vector.shape_cast %1061 : vector<1x8x128xf32> to vector<8x128xf32>
    %1063 = vector.shape_cast %958 : vector<8x128xf32> to vector<1x8x128xf32>
    tpu.vector_store %arg3[%c0_12, %c0_13, %c0_14], %1063 {strides = array<i32>} : memref<4x8x128xf32, #tpu.memory_space<vmem>>, vector<1x8x128xf32>,
    %c1_15 = arith.constant 1 : index
    %c0_16 = arith.constant 0 : index
    %c0_17 = arith.constant 0 : index
    %1064 = vector.load %arg3[%c1_15, %c0_16, %c0_17] : memref<4x8x128xf32, #tpu.memory_space<vmem>>, vector<1x8x128xf32>
    %1065 = vector.shape_cast %1064 : vector<1x8x128xf32> to vector<8x128xf32>
    %1066 = vector.shape_cast %992 : vector<8x128xf32> to vector<1x8x128xf32>
    tpu.vector_store %arg3[%c1_15, %c0_16, %c0_17], %1066 {strides = array<i32>} : memref<4x8x128xf32, #tpu.memory_space<vmem>>, vector<1x8x128xf32>,
    %c2_18 = arith.constant 2 : index
    %c0_19 = arith.constant 0 : index
    %c0_20 = arith.constant 0 : index
    %1067 = vector.load %arg3[%c2_18, %c0_19, %c0_20] : memref<4x8x128xf32, #tpu.memory_space<vmem>>, vector<1x8x128xf32>
    %1068 = vector.shape_cast %1067 : vector<1x8x128xf32> to vector<8x128xf32>
    %1069 = vector.shape_cast %1026 : vector<8x128xf32> to vector<1x8x128xf32>
    tpu.vector_store %arg3[%c2_18, %c0_19, %c0_20], %1069 {strides = array<i32>} : memref<4x8x128xf32, #tpu.memory_space<vmem>>, vector<1x8x128xf32>,
    %c3_21 = arith.constant 3 : index
    %c0_22 = arith.constant 0 : index
    %c0_23 = arith.constant 0 : index
    %1070 = vector.load %arg3[%c3_21, %c0_22, %c0_23] : memref<4x8x128xf32, #tpu.memory_space<vmem>>, vector<1x8x128xf32>
    %1071 = vector.shape_cast %1070 : vector<1x8x128xf32> to vector<8x128xf32>
    %1072 = vector.shape_cast %1060 : vector<8x128xf32> to vector<1x8x128xf32>
    tpu.vector_store %arg3[%c3_21, %c0_22, %c0_23], %1072 {strides = array<i32>} : memref<4x8x128xf32, #tpu.memory_space<vmem>>, vector<1x8x128xf32>,
    return
  }
  func.func @transform_0(%arg0: i32) -> i32 {
    %c0_i32 = arith.constant 0 : i32
    %c0_i32_0 = arith.constant 0 : i32
    return %c0_i32 : i32
  }
  func.func @transform_1(%arg0: i32) -> (i32, i32, i32) {
    %c0_i32 = arith.constant 0 : i32
    %c0_i32_0 = arith.constant 0 : i32
    %c0_i32_1 = arith.constant 0 : i32
    return %c0_i32, %arg0, %c0_i32_0 : i32, i32, i32
  }
  func.func @transform_2(%arg0: i32) -> (i32, i32, i32) {
    %c0_i32 = arith.constant 0 : i32
    %c0_i32_0 = arith.constant 0 : i32
    %c0_i32_1 = arith.constant 0 : i32
    return %c0_i32, %arg0, %c0_i32_0 : i32, i32, i32
  }
}

</mosaic_0001>

<llo_original>
// kernel: ae_big_forward.1
$region0: #{ae_big_forward.1}
  #allocation0 [shape = 'u32[]', space=smem, size = 0x4, offset = 0x4, fixed_abs, tag = 'smem constant byte address 0x4 - core index']
  #allocation1 [shape = 'u32[144,128]{1,0:T(1,128)}', space=vmem, size = 0x12000, scoped, tag = 'internal scratch']
  %s0 = inlined_call_operand.vmem [shape: f32[275], index: 0, kind: input, shape index: {}]
  %s1 = inlined_call_operand.vmem [shape: f32[4,8,128], index: 1, kind: input, shape index: {}]
  %s2 = inlined_call_operand.vmem [shape: f32[4,8,128], index: 2, kind: output, shape index: {}]
  %s3 = sld [smem:[#allocation0]]
  $region22: #{ae_big_forward.1} parent=0
    _
  %s5 = ssub.s32 1, %s3
  %s6 = scalar_select 0, %s5, %s3
  $region1: #{ae_big_forward.1} parent=0
    #allocation2 [shape = 'u8[1536]{0}', space=smem, size = 0x600, scoped, tag = 'input window, operand 0, single buffered']
    #allocation3 [shape = 's32[1]{0}', space=sflag, size = 0x4, scoped, tag = 'scoped memory for ae_big_forward.1']
    %7 = vsyncpa [#allocation3], 0
    // Predicated region
    $region2: #{ae_big_forward.1} parent=1 // pred_check
      _
    $region3: #{ae_big_forward.1} parent=1 // pred_check_branch
      %9 = sbr.rel (0) target = $region5
    $region4: #{ae_big_forward.1} parent=1 // pred_region
      %s11 = ssub.s32 48, 48
      %12 = vsyncadd [#allocation3], %s11
      %s14 = sshll.u32 %s0, 4
      %s15 = int_to_ptr.vmem [resolvable:$true] %s14
      %17 = dma.vmem_to_smem %s15, 48, [#allocation2], [#allocation3]
    $region5: #{ae_big_forward.1} parent=1 // pred_fallthru
      _
    // Predicated region
    $region6: #{ae_big_forward.1} parent=1 // pred_check
      _
    $region7: #{ae_big_forward.1} parent=1 // pred_check_branch
      %19 = sbr.rel (0) target = $region9
    $region8: #{ae_big_forward.1} parent=1 // pred_region
      _
    $region9: #{ae_big_forward.1} parent=1 // pred_fallthru
      _
    // Predicated region
    $region10: #{ae_big_forward.1} parent=1 // pred_check
      _
    $region11: #{ae_big_forward.1} parent=1 // pred_check_branch
      %21 = sbr.rel (0) target = $region13
    $region12: #{ae_big_forward.1} parent=1 // pred_region
      %22 = dma.done [#allocation3], 48
    $region13: #{ae_big_forward.1} parent=1 // pred_fallthru
      _
    %23 = sfence
    %v24 = vld [vmem:[%s1] sm:$0xff]
    %s25 = scalar_lea.vmem %s1, 8
    %v26 = vld [vmem:[%s25] sm:$0xff]
    %s27 = scalar_lea.vmem %s1, 16
    %v28 = vld [vmem:[%s27] sm:$0xff]
    %s29 = scalar_lea.vmem %s1, 24
    %v30 = vld [vmem:[%s29] sm:$0xff]
    %s31 = sld [smem:[#allocation2]]
    %v32 = vstv %s31
    %v33 = vmul.f32 %v24, %v32
    %s34 = sld [smem:[#allocation2 + $0x8]]
    %v35 = vstv %s34
    %v36 = vmul.f32 %v26, %v35
    %v37 = vadd.f32 %v33, %v36
    %s38 = sld [smem:[#allocation2 + $0x10]]
    %v39 = vstv %s38
    %v40 = vmul.f32 %v28, %v39
    %v41 = vadd.f32 %v37, %v40
    %s42 = sld [smem:[#allocation2 + $0x18]]
    %v43 = vstv %s42
    %v44 = vmul.f32 %v30, %v43
    %v45 = vadd.f32 %v41, %v44
    %s46 = sld [smem:[#allocation2 + $0x20]]
    %v47 = vstv %s46
    %v48 = vadd.f32 %v45, %v47
    %v49 = vtanh.pop %v48
    %s50 = sld [smem:[#allocation2 + $0x1]]
    %v51 = vstv %s50
    %v52 = vmul.f32 %v24, %v51
    %s53 = sld [smem:[#allocation2 + $0x9]]
    %v54 = vstv %s53
    %v55 = vmul.f32 %v26, %v54
    %v56 = vadd.f32 %v52, %v55
    %s57 = sld [smem:[#allocation2 + $0x11]]
    %v58 = vstv %s57
    %v59 = vmul.f32 %v28, %v58
    %v60 = vadd.f32 %v56, %v59
    %s61 = sld [smem:[#allocation2 + $0x19]]
    %v62 = vstv %s61
    %v63 = vmul.f32 %v30, %v62
    %v64 = vadd.f32 %v60, %v63
    %s65 = sld [smem:[#allocation2 + $0x21]]
    %v66 = vstv %s65
    %v67 = vadd.f32 %v64, %v66
    %v68 = vtanh.pop %v67
    %s69 = sld [smem:[#allocation2 + $0x2]]
    %v70 = vstv %s69
    %v71 = vmul.f32 %v24, %v70
    %s72 = sld [smem:[#allocation2 + $0xa]]
    %v73 = vstv %s72
    %v74 = vmul.f32 %v26, %v73
    %v75 = vadd.f32 %v71, %v74
    %s76 = sld [smem:[#allocation2 + $0x12]]
    %v77 = vstv %s76
    %v78 = vmul.f32 %v28, %v77
    %v79 = vadd.f32 %v75, %v78
    %s80 = sld [smem:[#allocation2 + $0x1a]]
    %v81 = vstv %s80
    %v82 = vmul.f32 %v30, %v81
    %v83 = vadd.f32 %v79, %v82
    %s84 = sld [smem:[#allocation2 + $0x22]]
    %v85 = vstv %s84
    %v86 = vadd.f32 %v83, %v85
    %v87 = vtanh.pop %v86
    %s88 = sld [smem:[#allocation2 + $0x3]]
    %v89 = vstv %s88
    %v90 = vmul.f32 %v24, %v89
    %s91 = sld [smem:[#allocation2 + $0xb]]
    %v92 = vstv %s91
    %v93 = vmul.f32 %v26, %v92
    %v94 = vadd.f32 %v90, %v93
    %s95 = sld [smem:[#allocation2 + $0x13]]
    %v96 = vstv %s95
    %v97 = vmul.f32 %v28, %v96
    %v98 = vadd.f32 %v94, %v97
    %s99 = sld [smem:[#allocation2 + $0x1b]]
    %v100 = vstv %s99
    %v101 = vmul.f32 %v30, %v100
    %v102 = vadd.f32 %v98, %v101
    %s103 = sld [smem:[#allocation2 + $0x23]]
    %v104 = vstv %s103
    %v105 = vadd.f32 %v102, %v104
    %v106 = vtanh.pop %v105
    %s107 = sld [smem:[#allocation2 + $0x4]]
    %v108 = vstv %s107
    %v109 = vmul.f32 %v24, %v108
    %s110 = sld [smem:[#allocation2 + $0xc]]
    %v111 = vstv %s110
    %v112 = vmul.f32 %v26, %v111
    %v113 = vadd.f32 %v109, %v112
    %s114 = sld [smem:[#allocation2 + $0x14]]
    %v115 = vstv %s114
    %v116 = vmul.f32 %v28, %v115
    %v117 = vadd.f32 %v113, %v116
    %s118 = sld [smem:[#allocation2 + $0x1c]]
    %v119 = vstv %s118
    %v120 = vmul.f32 %v30, %v119
    %v121 = vadd.f32 %v117, %v120
    %s122 = sld [smem:[#allocation2 + $0x24]]
    %v123 = vstv %s122
    %v124 = vadd.f32 %v121, %v123
    %v125 = vtanh.pop %v124
    %s126 = sld [smem:[#allocation2 + $0x5]]
    %v127 = vstv %s126
    %v128 = vmul.f32 %v24, %v127
    %s129 = sld [smem:[#allocation2 + $0xd]]
    %v130 = vstv %s129
    %v131 = vmul.f32 %v26, %v130
    %v132 = vadd.f32 %v128, %v131
    %s133 = sld [smem:[#allocation2 + $0x15]]
    %v134 = vstv %s133
    %v135 = vmul.f32 %v28, %v134
    %v136 = vadd.f32 %v132, %v135
    %s137 = sld [smem:[#allocation2 + $0x1d]]
    %v138 = vstv %s137
    %v139 = vmul.f32 %v30, %v138
    %v140 = vadd.f32 %v136, %v139
    %s141 = sld [smem:[#allocation2 + $0x25]]
    %v142 = vstv %s141
    %v143 = vadd.f32 %v140, %v142
    %v144 = vtanh.pop %v143
    %s145 = sld [smem:[#allocation2 + $0x6]]
    %v146 = vstv %s145
    %v147 = vmul.f32 %v24, %v146
    %s148 = sld [smem:[#allocation2 + $0xe]]
    %v149 = vstv %s148
    %v150 = vmul.f32 %v26, %v149
    %v151 = vadd.f32 %v147, %v150
    %s152 = sld [smem:[#allocation2 + $0x16]]
    %v153 = vstv %s152
    %v154 = vmul.f32 %v28, %v153
    %v155 = vadd.f32 %v151, %v154
    %s156 = sld [smem:[#allocation2 + $0x1e]]
    %v157 = vstv %s156
    %v158 = vmul.f32 %v30, %v157
    %v159 = vadd.f32 %v155, %v158
    %s160 = sld [smem:[#allocation2 + $0x26]]
    %v161 = vstv %s160
    %v162 = vadd.f32 %v159, %v161
    %v163 = vtanh.pop %v162
    %s164 = sld [smem:[#allocation2 + $0x7]]
    %v165 = vstv %s164
    %v166 = vmul.f32 %v24, %v165
    %s167 = sld [smem:[#allocation2 + $0xf]]
    %v168 = vstv %s167
    %v169 = vmul.f32 %v26, %v168
    %v170 = vadd.f32 %v166, %v169
    %s171 = sld [smem:[#allocation2 + $0x17]]
    %v172 = vstv %s171
    %v173 = vmul.f32 %v28, %v172
    %v174 = vadd.f32 %v170, %v173
    %s175 = sld [smem:[#allocation2 + $0x1f]]
    %v176 = vstv %s175
    %v177 = vmul.f32 %v30, %v176
    %v178 = vadd.f32 %v174, %v177
    %s179 = sld [smem:[#allocation2 + $0x27]]
    %v180 = vstv %s179
    %v181 = vadd.f32 %v178, %v180
    %v182 = vtanh.pop %v181
    %s183 = sld [smem:[#allocation2 + $0x28]]
    %v184 = vstv %s183
    %v185 = vmul.f32 %v49, %v184
    %s186 = sld [smem:[#allocation2 + $0x2e]]
    %v187 = vstv %s186
    %v188 = vmul.f32 %v68, %v187
    %v189 = vadd.f32 %v185, %v188
    %s190 = sld [smem:[#allocation2 + $0x34]]
    %v191 = vstv %s190
    %v192 = vmul.f32 %v87, %v191
    %v193 = vadd.f32 %v189, %v192
    %s194 = sld [smem:[#allocation2 + $0x3a]]
    %v195 = vstv %s194
    %v196 = vmul.f32 %v106, %v195
    %v197 = vadd.f32 %v193, %v196
    %s198 = sld [smem:[#allocation2 + $0x40]]
    %v199 = vstv %s198
    %v200 = vmul.f32 %v125, %v199
    %v201 = vadd.f32 %v197, %v200
    %s202 = sld [smem:[#allocation2 + $0x46]]
    %v203 = vstv %s202
    %v204 = vmul.f32 %v144, %v203
    %v205 = vadd.f32 %v201, %v204
    %s206 = sld [smem:[#allocation2 + $0x4c]]
    %v207 = vstv %s206
    %v208 = vmul.f32 %v163, %v207
    %v209 = vadd.f32 %v205, %v208
    %s210 = sld [smem:[#allocation2 + $0x52]]
    %v211 = vstv %s210
    %v212 = vmul.f32 %v182, %v211
    %v213 = vadd.f32 %v209, %v212
    %s214 = sld [smem:[#allocation2 + $0x58]]
    %v215 = vstv %s214
    %v216 = vadd.f32 %v213, %v215
    %v217 = vtanh.pop %v216
    %s218 = sld [smem:[#allocation2 + $0x29]]
    %v219 = vstv %s218
    %v220 = vmul.f32 %v49, %v219
    %s221 = sld [smem:[#allocation2 + $0x2f]]
    %v222 = vstv %s221
    %v223 = vmul.f32 %v68, %v222
    %v224 = vadd.f32 %v220, %v223
    %s225 = sld [smem:[#allocation2 + $0x35]]
    %v226 = vstv %s225
    %v227 = vmul.f32 %v87, %v226
    %v228 = vadd.f32 %v224, %v227
    %s229 = sld [smem:[#allocation2 + $0x3b]]
    %v230 = vstv %s229
    %v231 = vmul.f32 %v106, %v230
    %v232 = vadd.f32 %v228, %v231
    %s233 = sld [smem:[#allocation2 + $0x41]]
    %v234 = vstv %s233
    %v235 = vmul.f32 %v125, %v234
    %v236 = vadd.f32 %v232, %v235
    %s237 = sld [smem:[#allocation2 + $0x47]]
    %v238 = vstv %s237
    %v239 = vmul.f32 %v144, %v238
    %v240 = vadd.f32 %v236, %v239
    %s241 = sld [smem:[#allocation2 + $0x4d]]
    %v242 = vstv %s241
    %v243 = vmul.f32 %v163, %v242
    %v244 = vadd.f32 %v240, %v243
    %s245 = sld [smem:[#allocation2 + $0x53]]
    %v246 = vstv %s245
    %v247 = vmul.f32 %v182, %v246
    %v248 = vadd.f32 %v244, %v247
    %s249 = sld [smem:[#allocation2 + $0x59]]
    %v250 = vstv %s249
    %v251 = vadd.f32 %v248, %v250
    %v252 = vtanh.pop %v251
    %s253 = sld [smem:[#allocation2 + $0x2a]]
    %v254 = vstv %s253
    %v255 = vmul.f32 %v49, %v254
    %s256 = sld [smem:[#allocation2 + $0x30]]
    %v257 = vstv %s256
    %v258 = vmul.f32 %v68, %v257
    %v259 = vadd.f32 %v255, %v258
    %s260 = sld [smem:[#allocation2 + $0x36]]
    %v261 = vstv %s260
    %v262 = vmul.f32 %v87, %v261
    %v263 = vadd.f32 %v259, %v262
    %s264 = sld [smem:[#allocation2 + $0x3c]]
    %v265 = vstv %s264
    %v266 = vmul.f32 %v106, %v265
    %v267 = vadd.f32 %v263, %v266
    %s268 = sld [smem:[#allocation2 + $0x42]]
    %v269 = vstv %s268
    %v270 = vmul.f32 %v125, %v269
    %v271 = vadd.f32 %v267, %v270
    %s272 = sld [smem:[#allocation2 + $0x48]]
    %v273 = vstv %s272
    %v274 = vmul.f32 %v144, %v273
    %v275 = vadd.f32 %v271, %v274
    %s276 = sld [smem:[#allocation2 + $0x4e]]
    %v277 = vstv %s276
    %v278 = vmul.f32 %v163, %v277
    %v279 = vadd.f32 %v275, %v278
    %s280 = sld [smem:[#allocation2 + $0x54]]
    %v281 = vstv %s280
    %v282 = vmul.f32 %v182, %v281
    %v283 = vadd.f32 %v279, %v282
    %s284 = sld [smem:[#allocation2 + $0x5a]]
    %v285 = vstv %s284
    %v286 = vadd.f32 %v283, %v285
    %v287 = vtanh.pop %v286
    %s288 = sld [smem:[#allocation2 + $0x2b]]
    %v289 = vstv %s288
    %v290 = vmul.f32 %v49, %v289
    %s291 = sld [smem:[#allocation2 + $0x31]]
    %v292 = vstv %s291
    %v293 = vmul.f32 %v68, %v292
    %v294 = vadd.f32 %v290, %v293
    %s295 = sld [smem:[#allocation2 + $0x37]]
    %v296 = vstv %s295
    %v297 = vmul.f32 %v87, %v296
    %v298 = vadd.f32 %v294, %v297
    %s299 = sld [smem:[#allocation2 + $0x3d]]
    %v300 = vstv %s299
    %v301 = vmul.f32 %v106, %v300
    %v302 = vadd.f32 %v298, %v301
    %s303 = sld [smem:[#allocation2 + $0x43]]
    %v304 = vstv %s303
    %v305 = vmul.f32 %v125, %v304
    %v306 = vadd.f32 %v302, %v305
    %s307 = sld [smem:[#allocation2 + $0x49]]
    %v308 = vstv %s307
    %v309 = vmul.f32 %v144, %v308
    %v310 = vadd.f32 %v306, %v309
    %s311 = sld [smem:[#allocation2 + $0x4f]]
    %v312 = vstv %s311
    %v313 = vmul.f32 %v163, %v312
    %v314 = vadd.f32 %v310, %v313
    %s315 = sld [smem:[#allocation2 + $0x55]]
    %v316 = vstv %s315
    %v317 = vmul.f32 %v182, %v316
    %v318 = vadd.f32 %v314, %v317
    %s319 = sld [smem:[#allocation2 + $0x5b]]
    %v320 = vstv %s319
    %v321 = vadd.f32 %v318, %v320
    %v322 = vtanh.pop %v321
    %s323 = sld [smem:[#allocation2 + $0x2c]]
    %v324 = vstv %s323
    %v325 = vmul.f32 %v49, %v324
    %s326 = sld [smem:[#allocation2 + $0x32]]
    %v327 = vstv %s326
    %v328 = vmul.f32 %v68, %v327
    %v329 = vadd.f32 %v325, %v328
    %s330 = sld [smem:[#allocation2 + $0x38]]
    %v331 = vstv %s330
    %v332 = vmul.f32 %v87, %v331
    %v333 = vadd.f32 %v329, %v332
    %s334 = sld [smem:[#allocation2 + $0x3e]]
    %v335 = vstv %s334
    %v336 = vmul.f32 %v106, %v335
    %v337 = vadd.f32 %v333, %v336
    %s338 = sld [smem:[#allocation2 + $0x44]]
    %v339 = vstv %s338
    %v340 = vmul.f32 %v125, %v339
    %v341 = vadd.f32 %v337, %v340
    %s342 = sld [smem:[#allocation2 + $0x4a]]
    %v343 = vstv %s342
    %v344 = vmul.f32 %v144, %v343
    %v345 = vadd.f32 %v341, %v344
    %s346 = sld [smem:[#allocation2 + $0x50]]
    %v347 = vstv %s346
    %v348 = vmul.f32 %v163, %v347
    %v349 = vadd.f32 %v345, %v348
    %s350 = sld [smem:[#allocation2 + $0x56]]
    %v351 = vstv %s350
    %v352 = vmul.f32 %v182, %v351
    %v353 = vadd.f32 %v349, %v352
    %s354 = sld [smem:[#allocation2 + $0x5c]]
    %v355 = vstv %s354
    %v356 = vadd.f32 %v353, %v355
    %v357 = vtanh.pop %v356
    %s358 = sld [smem:[#allocation2 + $0x2d]]
    %v359 = vstv %s358
    %v360 = vmul.f32 %v49, %v359
    %s361 = sld [smem:[#allocation2 + $0x33]]
    %v362 = vstv %s361
    %v363 = vmul.f32 %v68, %v362
    %v364 = vadd.f32 %v360, %v363
    %s365 = sld [smem:[#allocation2 + $0x39]]
    %v366 = vstv %s365
    %v367 = vmul.f32 %v87, %v366
    %v368 = vadd.f32 %v364, %v367
    %s369 = sld [smem:[#allocation2 + $0x3f]]
    %v370 = vstv %s369
    %v371 = vmul.f32 %v106, %v370
    %v372 = vadd.f32 %v368, %v371
    %s373 = sld [smem:[#allocation2 + $0x45]]
    %v374 = vstv %s373
    %v375 = vmul.f32 %v125, %v374
    %v376 = vadd.f32 %v372, %v375
    %s377 = sld [smem:[#allocation2 + $0x4b]]
    %v378 = vstv %s377
    %v379 = vmul.f32 %v144, %v378
    %v380 = vadd.f32 %v376, %v379
    %s381 = sld [smem:[#allocation2 + $0x51]]
    %v382 = vstv %s381
    %v383 = vmul.f32 %v163, %v382
    %v384 = vadd.f32 %v380, %v383
    %s385 = sld [smem:[#allocation2 + $0x57]]
    %v386 = vstv %s385
    %v387 = vmul.f32 %v182, %v386
    %v388 = vadd.f32 %v384, %v387
    %s389 = sld [smem:[#allocation2 + $0x5d]]
    %v390 = vstv %s389
    %v391 = vadd.f32 %v388, %v390
    %v392 = vtanh.pop %v391
    %s393 = sld [smem:[#allocation2 + $0x5e]]
    %v394 = vstv %s393
    %v395 = vmul.f32 %v217, %v394
    %s396 = sld [smem:[#allocation2 + $0x62]]
    %v397 = vstv %s396
    %v398 = vmul.f32 %v252, %v397
    %v399 = vadd.f32 %v395, %v398
    %s400 = sld [smem:[#allocation2 + $0x66]]
    %v401 = vstv %s400
    %v402 = vmul.f32 %v287, %v401
    %v403 = vadd.f32 %v399, %v402
    %s404 = sld [smem:[#allocation2 + $0x6a]]
    %v405 = vstv %s404
    %v406 = vmul.f32 %v322, %v405
    %v407 = vadd.f32 %v403, %v406
    %s408 = sld [smem:[#allocation2 + $0x6e]]
    %v409 = vstv %s408
    %v410 = vmul.f32 %v357, %v409
    %v411 = vadd.f32 %v407, %v410
    %s412 = sld [smem:[#allocation2 + $0x72]]
    %v413 = vstv %s412
    %v414 = vmul.f32 %v392, %v413
    %v415 = vadd.f32 %v411, %v414
    %s416 = sld [smem:[#allocation2 + $0x76]]
    %v417 = vstv %s416
    %v418 = vadd.f32 %v415, %v417
    %v419 = vtanh.pop %v418
    %s420 = sld [smem:[#allocation2 + $0x5f]]
    %v421 = vstv %s420
    %v422 = vmul.f32 %v217, %v421
    %s423 = sld [smem:[#allocation2 + $0x63]]
    %v424 = vstv %s423
    %v425 = vmul.f32 %v252, %v424
    %v426 = vadd.f32 %v422, %v425
    %s427 = sld [smem:[#allocation2 + $0x67]]
    %v428 = vstv %s427
    %v429 = vmul.f32 %v287, %v428
    %v430 = vadd.f32 %v426, %v429
    %s431 = sld [smem:[#allocation2 + $0x6b]]
    %v432 = vstv %s431
    %v433 = vmul.f32 %v322, %v432
    %v434 = vadd.f32 %v430, %v433
    %s435 = sld [smem:[#allocation2 + $0x6f]]
    %v436 = vstv %s435
    %v437 = vmul.f32 %v357, %v436
    %v438 = vadd.f32 %v434, %v437
    %s439 = sld [smem:[#allocation2 + $0x73]]
    %v440 = vstv %s439
    %v441 = vmul.f32 %v392, %v440
    %v442 = vadd.f32 %v438, %v441
    %s443 = sld [smem:[#allocation2 + $0x77]]
    %v444 = vstv %s443
    %v445 = vadd.f32 %v442, %v444
    %v446 = vtanh.pop %v445
    %s447 = sld [smem:[#allocation2 + $0x60]]
    %v448 = vstv %s447
    %v449 = vmul.f32 %v217, %v448
    %s450 = sld [smem:[#allocation2 + $0x64]]
    %v451 = vstv %s450
    %v452 = vmul.f32 %v252, %v451
    %v453 = vadd.f32 %v449, %v452
    %s454 = sld [smem:[#allocation2 + $0x68]]
    %v455 = vstv %s454
    %v456 = vmul.f32 %v287, %v455
    %v457 = vadd.f32 %v453, %v456
    %s458 = sld [smem:[#allocation2 + $0x6c]]
    %v459 = vstv %s458
    %v460 = vmul.f32 %v322, %v459
    %v461 = vadd.f32 %v457, %v460
    %s462 = sld [smem:[#allocation2 + $0x70]]
    %v463 = vstv %s462
    %v464 = vmul.f32 %v357, %v463
    %v465 = vadd.f32 %v461, %v464
    %s466 = sld [smem:[#allocation2 + $0x74]]
    %v467 = vstv %s466
    %v468 = vmul.f32 %v392, %v467
    %v469 = vadd.f32 %v465, %v468
    %s470 = sld [smem:[#allocation2 + $0x78]]
    %v471 = vstv %s470
    %v472 = vadd.f32 %v469, %v471
    %v473 = vtanh.pop %v472
    %s474 = sld [smem:[#allocation2 + $0x61]]
    %v475 = vstv %s474
    %v476 = vmul.f32 %v217, %v475
    %s477 = sld [smem:[#allocation2 + $0x65]]
    %v478 = vstv %s477
    %v479 = vmul.f32 %v252, %v478
    %v480 = vadd.f32 %v476, %v479
    %s481 = sld [smem:[#allocation2 + $0x69]]
    %v482 = vstv %s481
    %v483 = vmul.f32 %v287, %v482
    %v484 = vadd.f32 %v480, %v483
    %s485 = sld [smem:[#allocation2 + $0x6d]]
    %v486 = vstv %s485
    %v487 = vmul.f32 %v322, %v486
    %v488 = vadd.f32 %v484, %v487
    %s489 = sld [smem:[#allocation2 + $0x71]]
    %v490 = vstv %s489
    %v491 = vmul.f32 %v357, %v490
    %v492 = vadd.f32 %v488, %v491
    %s493 = sld [smem:[#allocation2 + $0x75]]
    %v494 = vstv %s493
    %v495 = vmul.f32 %v392, %v494
    %v496 = vadd.f32 %v492, %v495
    %s497 = sld [smem:[#allocation2 + $0x79]]
    %v498 = vstv %s497
    %v499 = vadd.f32 %v496, %v498
    %v500 = vtanh.pop %v499
    %s501 = sld [smem:[#allocation2 + $0x7a]]
    %v502 = vstv %s501
    %v503 = vmul.f32 %v419, %v502
    %s504 = sld [smem:[#allocation2 + $0x7d]]
    %v505 = vstv %s504
    %v506 = vmul.f32 %v446, %v505
    %v507 = vadd.f32 %v503, %v506
    %s508 = sld [smem:[#allocation2 + $0x80]]
    %v509 = vstv %s508
    %v510 = vmul.f32 %v473, %v509
    %v511 = vadd.f32 %v507, %v510
    %s512 = sld [smem:[#allocation2 + $0x83]]
    %v513 = vstv %s512
    %v514 = vmul.f32 %v500, %v513
    %v515 = vadd.f32 %v511, %v514
    %s516 = sld [smem:[#allocation2 + $0x86]]
    %v517 = vstv %s516
    %v518 = vadd.f32 %v515, %v517
    %v519 = vtanh.pop %v518
    %s520 = sld [smem:[#allocation2 + $0x7b]]
    %v521 = vstv %s520
    %v522 = vmul.f32 %v419, %v521
    %s523 = sld [smem:[#allocation2 + $0x7e]]
    %v524 = vstv %s523
    %v525 = vmul.f32 %v446, %v524
    %v526 = vadd.f32 %v522, %v525
    %s527 = sld [smem:[#allocation2 + $0x81]]
    %v528 = vstv %s527
    %v529 = vmul.f32 %v473, %v528
    %v530 = vadd.f32 %v526, %v529
    %s531 = sld [smem:[#allocation2 + $0x84]]
    %v532 = vstv %s531
    %v533 = vmul.f32 %v500, %v532
    %v534 = vadd.f32 %v530, %v533
    %s535 = sld [smem:[#allocation2 + $0x87]]
    %v536 = vstv %s535
    %v537 = vadd.f32 %v534, %v536
    %v538 = vtanh.pop %v537
    %s539 = sld [smem:[#allocation2 + $0x7c]]
    %v540 = vstv %s539
    %v541 = vmul.f32 %v419, %v540
    %s542 = sld [smem:[#allocation2 + $0x7f]]
    %v543 = vstv %s542
    %v544 = vmul.f32 %v446, %v543
    %v545 = vadd.f32 %v541, %v544
    %s546 = sld [smem:[#allocation2 + $0x82]]
    %v547 = vstv %s546
    %v548 = vmul.f32 %v473, %v547
    %v549 = vadd.f32 %v545, %v548
    %s550 = sld [smem:[#allocation2 + $0x85]]
    %v551 = vstv %s550
    %v552 = vmul.f32 %v500, %v551
    %v553 = vadd.f32 %v549, %v552
    %s554 = sld [smem:[#allocation2 + $0x88]]
    %v555 = vstv %s554
    %v556 = vadd.f32 %v553, %v555
    %v557 = vtanh.pop %v556
    %s558 = sld [smem:[#allocation2 + $0x89]]
    %v559 = vstv %s558
    %v560 = vmul.f32 %v519, %v559
    %s561 = sld [smem:[#allocation2 + $0x8d]]
    %v562 = vstv %s561
    %v563 = vmul.f32 %v538, %v562
    %v564 = vadd.f32 %v560, %v563
    %s565 = sld [smem:[#allocation2 + $0x91]]
    %v566 = vstv %s565
    %v567 = vmul.f32 %v557, %v566
    %v568 = vadd.f32 %v564, %v567
    %s569 = sld [smem:[#allocation2 + $0x95]]
    %v570 = vstv %s569
    %v571 = vadd.f32 %v568, %v570
    %v572 = vtanh.pop %v571
    %s573 = sld [smem:[#allocation2 + $0x8a]]
    %v574 = vstv %s573
    %v575 = vmul.f32 %v519, %v574
    %s576 = sld [smem:[#allocation2 + $0x8e]]
    %v577 = vstv %s576
    %v578 = vmul.f32 %v538, %v577
    %v579 = vadd.f32 %v575, %v578
    %s580 = sld [smem:[#allocation2 + $0x92]]
    %v581 = vstv %s580
    %v582 = vmul.f32 %v557, %v581
    %v583 = vadd.f32 %v579, %v582
    %s584 = sld [smem:[#allocation2 + $0x96]]
    %v585 = vstv %s584
    %v586 = vadd.f32 %v583, %v585
    %v587 = vtanh.pop %v586
    %s588 = sld [smem:[#allocation2 + $0x8b]]
    %v589 = vstv %s588
    %v590 = vmul.f32 %v519, %v589
    %s591 = sld [smem:[#allocation2 + $0x8f]]
    %v592 = vstv %s591
    %v593 = vmul.f32 %v538, %v592
    %v594 = vadd.f32 %v590, %v593
    %s595 = sld [smem:[#allocation2 + $0x93]]
    %v596 = vstv %s595
    %v597 = vmul.f32 %v557, %v596
    %v598 = vadd.f32 %v594, %v597
    %s599 = sld [smem:[#allocation2 + $0x97]]
    %v600 = vstv %s599
    %v601 = vadd.f32 %v598, %v600
    %v602 = vtanh.pop %v601
    %s603 = sld [smem:[#allocation2 + $0x8c]]
    %v604 = vstv %s603
    %v605 = vmul.f32 %v519, %v604
    %s606 = sld [smem:[#allocation2 + $0x90]]
    %v607 = vstv %s606
    %v608 = vmul.f32 %v538, %v607
    %v609 = vadd.f32 %v605, %v608
    %s610 = sld [smem:[#allocation2 + $0x94]]
    %v611 = vstv %s610
    %v612 = vmul.f32 %v557, %v611
    %v613 = vadd.f32 %v609, %v612
    %s614 = sld [smem:[#allocation2 + $0x98]]
    %v615 = vstv %s614
    %v616 = vadd.f32 %v613, %v615
    %v617 = vtanh.pop %v616
    %s618 = sld [smem:[#allocation2 + $0x99]]
    %v619 = vstv %s618
    %v620 = vmul.f32 %v572, %v619
    %s621 = sld [smem:[#allocation2 + $0x9f]]
    %v622 = vstv %s621
    %v623 = vmul.f32 %v587, %v622
    %v624 = vadd.f32 %v620, %v623
    %s625 = sld [smem:[#allocation2 + $0xa5]]
    %v626 = vstv %s625
    %v627 = vmul.f32 %v602, %v626
    %v628 = vadd.f32 %v624, %v627
    %s629 = sld [smem:[#allocation2 + $0xab]]
    %v630 = vstv %s629
    %v631 = vmul.f32 %v617, %v630
    %v632 = vadd.f32 %v628, %v631
    %s633 = sld [smem:[#allocation2 + $0xb1]]
    %v634 = vstv %s633
    %v635 = vadd.f32 %v632, %v634
    %v636 = vtanh.pop %v635
    %s637 = sld [smem:[#allocation2 + $0x9a]]
    %v638 = vstv %s637
    %v639 = vmul.f32 %v572, %v638
    %s640 = sld [smem:[#allocation2 + $0xa0]]
    %v641 = vstv %s640
    %v642 = vmul.f32 %v587, %v641
    %v643 = vadd.f32 %v639, %v642
    %s644 = sld [smem:[#allocation2 + $0xa6]]
    %v645 = vstv %s644
    %v646 = vmul.f32 %v602, %v645
    %v647 = vadd.f32 %v643, %v646
    %s648 = sld [smem:[#allocation2 + $0xac]]
    %v649 = vstv %s648
    %v650 = vmul.f32 %v617, %v649
    %v651 = vadd.f32 %v647, %v650
    %s652 = sld [smem:[#allocation2 + $0xb2]]
    %v653 = vstv %s652
    %v654 = vadd.f32 %v651, %v653
    %v655 = vtanh.pop %v654
    %s656 = sld [smem:[#allocation2 + $0x9b]]
    %v657 = vstv %s656
    %v658 = vmul.f32 %v572, %v657
    %s659 = sld [smem:[#allocation2 + $0xa1]]
    %v660 = vstv %s659
    %v661 = vmul.f32 %v587, %v660
    %v662 = vadd.f32 %v658, %v661
    %s663 = sld [smem:[#allocation2 + $0xa7]]
    %v664 = vstv %s663
    %v665 = vmul.f32 %v602, %v664
    %v666 = vadd.f32 %v662, %v665
    %s667 = sld [smem:[#allocation2 + $0xad]]
    %v668 = vstv %s667
    %v669 = vmul.f32 %v617, %v668
    %v670 = vadd.f32 %v666, %v669
    %s671 = sld [smem:[#allocation2 + $0xb3]]
    %v672 = vstv %s671
    %v673 = vadd.f32 %v670, %v672
    %v674 = vtanh.pop %v673
    %s675 = sld [smem:[#allocation2 + $0x9c]]
    %v676 = vstv %s675
    %v677 = vmul.f32 %v572, %v676
    %s678 = sld [smem:[#allocation2 + $0xa2]]
    %v679 = vstv %s678
    %v680 = vmul.f32 %v587, %v679
    %v681 = vadd.f32 %v677, %v680
    %s682 = sld [smem:[#allocation2 + $0xa8]]
    %v683 = vstv %s682
    %v684 = vmul.f32 %v602, %v683
    %v685 = vadd.f32 %v681, %v684
    %s686 = sld [smem:[#allocation2 + $0xae]]
    %v687 = vstv %s686
    %v688 = vmul.f32 %v617, %v687
    %v689 = vadd.f32 %v685, %v688
    %s690 = sld [smem:[#allocation2 + $0xb4]]
    %v691 = vstv %s690
    %v692 = vadd.f32 %v689, %v691
    %v693 = vtanh.pop %v692
    %s694 = sld [smem:[#allocation2 + $0x9d]]
    %v695 = vstv %s694
    %v696 = vmul.f32 %v572, %v695
    %s697 = sld [smem:[#allocation2 + $0xa3]]
    %v698 = vstv %s697
    %v699 = vmul.f32 %v587, %v698
    %v700 = vadd.f32 %v696, %v699
    %s701 = sld [smem:[#allocation2 + $0xa9]]
    %v702 = vstv %s701
    %v703 = vmul.f32 %v602, %v702
    %v704 = vadd.f32 %v700, %v703
    %s705 = sld [smem:[#allocation2 + $0xaf]]
    %v706 = vstv %s705
    %v707 = vmul.f32 %v617, %v706
    %v708 = vadd.f32 %v704, %v707
    %s709 = sld [smem:[#allocation2 + $0xb5]]
    %v710 = vstv %s709
    %v711 = vadd.f32 %v708, %v710
    %v712 = vtanh.pop %v711
    %s713 = sld [smem:[#allocation2 + $0x9e]]
    %v714 = vstv %s713
    %v715 = vmul.f32 %v572, %v714
    %s716 = sld [smem:[#allocation2 + $0xa4]]
    %v717 = vstv %s716
    %v718 = vmul.f32 %v587, %v717
    %v719 = vadd.f32 %v715, %v718
    %s720 = sld [smem:[#allocation2 + $0xaa]]
    %v721 = vstv %s720
    %v722 = vmul.f32 %v602, %v721
    %v723 = vadd.f32 %v719, %v722
    %s724 = sld [smem:[#allocation2 + $0xb0]]
    %v725 = vstv %s724
    %v726 = vmul.f32 %v617, %v725
    %v727 = vadd.f32 %v723, %v726
    %s728 = sld [smem:[#allocation2 + $0xb6]]
    %v729 = vstv %s728
    %v730 = vadd.f32 %v727, %v729
    %v731 = vtanh.pop %v730
    %s732 = sld [smem:[#allocation2 + $0xb7]]
    %v733 = vstv %s732
    %v734 = vmul.f32 %v636, %v733
    %s735 = sld [smem:[#allocation2 + $0xbf]]
    %v736 = vstv %s735
    %v737 = vmul.f32 %v655, %v736
    %v738 = vadd.f32 %v734, %v737
    %s739 = sld [smem:[#allocation2 + $0xc7]]
    %v740 = vstv %s739
    %v741 = vmul.f32 %v674, %v740
    %v742 = vadd.f32 %v738, %v741
    %s743 = sld [smem:[#allocation2 + $0xcf]]
    %v744 = vstv %s743
    %v745 = vmul.f32 %v693, %v744
    %v746 = vadd.f32 %v742, %v745
    %s747 = sld [smem:[#allocation2 + $0xd7]]
    %v748 = vstv %s747
    %v749 = vmul.f32 %v712, %v748
    %v750 = vadd.f32 %v746, %v749
    %s751 = sld [smem:[#allocation2 + $0xdf]]
    %v752 = vstv %s751
    %v753 = vmul.f32 %v731, %v752
    %v754 = vadd.f32 %v750, %v753
    %s755 = sld [smem:[#allocation2 + $0xe7]]
    %v756 = vstv %s755
    %v757 = vadd.f32 %v754, %v756
    %v758 = vtanh.pop %v757
    %s759 = sld [smem:[#allocation2 + $0xb8]]
    %v760 = vstv %s759
    %v761 = vmul.f32 %v636, %v760
    %s762 = sld [smem:[#allocation2 + $0xc0]]
    %v763 = vstv %s762
    %v764 = vmul.f32 %v655, %v763
    %v765 = vadd.f32 %v761, %v764
    %s766 = sld [smem:[#allocation2 + $0xc8]]
    %v767 = vstv %s766
    %v768 = vmul.f32 %v674, %v767
    %v769 = vadd.f32 %v765, %v768
    %s770 = sld [smem:[#allocation2 + $0xd0]]
    %v771 = vstv %s770
    %v772 = vmul.f32 %v693, %v771
    %v773 = vadd.f32 %v769, %v772
    %s774 = sld [smem:[#allocation2 + $0xd8]]
    %v775 = vstv %s774
    %v776 = vmul.f32 %v712, %v775
    %v777 = vadd.f32 %v773, %v776
    %s778 = sld [smem:[#allocation2 + $0xe0]]
    %v779 = vstv %s778
    %v780 = vmul.f32 %v731, %v779
    %v781 = vadd.f32 %v777, %v780
    %s782 = sld [smem:[#allocation2 + $0xe8]]
    %v783 = vstv %s782
    %v784 = vadd.f32 %v781, %v783
    %v785 = vtanh.pop %v784
    %s786 = sld [smem:[#allocation2 + $0xb9]]
    %v787 = vstv %s786
    %v788 = vmul.f32 %v636, %v787
    %s789 = sld [smem:[#allocation2 + $0xc1]]
    %v790 = vstv %s789
    %v791 = vmul.f32 %v655, %v790
    %v792 = vadd.f32 %v788, %v791
    %s793 = sld [smem:[#allocation2 + $0xc9]]
    %v794 = vstv %s793
    %v795 = vmul.f32 %v674, %v794
    %v796 = vadd.f32 %v792, %v795
    %s797 = sld [smem:[#allocation2 + $0xd1]]
    %v798 = vstv %s797
    %v799 = vmul.f32 %v693, %v798
    %v800 = vadd.f32 %v796, %v799
    %s801 = sld [smem:[#allocation2 + $0xd9]]
    %v802 = vstv %s801
    %v803 = vmul.f32 %v712, %v802
    %v804 = vadd.f32 %v800, %v803
    %s805 = sld [smem:[#allocation2 + $0xe1]]
    %v806 = vstv %s805
    %v807 = vmul.f32 %v731, %v806
    %v808 = vadd.f32 %v804, %v807
    %s809 = sld [smem:[#allocation2 + $0xe9]]
    %v810 = vstv %s809
    %v811 = vadd.f32 %v808, %v810
    %v812 = vtanh.pop %v811
    %s813 = sld [smem:[#allocation2 + $0xba]]
    %v814 = vstv %s813
    %v815 = vmul.f32 %v636, %v814
    %s816 = sld [smem:[#allocation2 + $0xc2]]
    %v817 = vstv %s816
    %v818 = vmul.f32 %v655, %v817
    %v819 = vadd.f32 %v815, %v818
    %s820 = sld [smem:[#allocation2 + $0xca]]
    %v821 = vstv %s820
    %v822 = vmul.f32 %v674, %v821
    %v823 = vadd.f32 %v819, %v822
    %s824 = sld [smem:[#allocation2 + $0xd2]]
    %v825 = vstv %s824
    %v826 = vmul.f32 %v693, %v825
    %v827 = vadd.f32 %v823, %v826
    %s828 = sld [smem:[#allocation2 + $0xda]]
    %v829 = vstv %s828
    %v830 = vmul.f32 %v712, %v829
    %v831 = vadd.f32 %v827, %v830
    %s832 = sld [smem:[#allocation2 + $0xe2]]
    %v833 = vstv %s832
    %v834 = vmul.f32 %v731, %v833
    %v835 = vadd.f32 %v831, %v834
    %s836 = sld [smem:[#allocation2 + $0xea]]
    %v837 = vstv %s836
    %v838 = vadd.f32 %v835, %v837
    %v839 = vtanh.pop %v838
    %s840 = sld [smem:[#allocation2 + $0xbb]]
    %v841 = vstv %s840
    %v842 = vmul.f32 %v636, %v841
    %s843 = sld [smem:[#allocation2 + $0xc3]]
    %v844 = vstv %s843
    %v845 = vmul.f32 %v655, %v844
    %v846 = vadd.f32 %v842, %v845
    %s847 = sld [smem:[#allocation2 + $0xcb]]
    %v848 = vstv %s847
    %v849 = vmul.f32 %v674, %v848
    %v850 = vadd.f32 %v846, %v849
    %s851 = sld [smem:[#allocation2 + $0xd3]]
    %v852 = vstv %s851
    %v853 = vmul.f32 %v693, %v852
    %v854 = vadd.f32 %v850, %v853
    %s855 = sld [smem:[#allocation2 + $0xdb]]
    %v856 = vstv %s855
    %v857 = vmul.f32 %v712, %v856
    %v858 = vadd.f32 %v854, %v857
    %s859 = sld [smem:[#allocation2 + $0xe3]]
    %v860 = vstv %s859
    %v861 = vmul.f32 %v731, %v860
    %v862 = vadd.f32 %v858, %v861
    %s863 = sld [smem:[#allocation2 + $0xeb]]
    %v864 = vstv %s863
    %v865 = vadd.f32 %v862, %v864
    %v866 = vtanh.pop %v865
    %s867 = sld [smem:[#allocation2 + $0xbc]]
    %v868 = vstv %s867
    %v869 = vmul.f32 %v636, %v868
    %s870 = sld [smem:[#allocation2 + $0xc4]]
    %v871 = vstv %s870
    %v872 = vmul.f32 %v655, %v871
    %v873 = vadd.f32 %v869, %v872
    %s874 = sld [smem:[#allocation2 + $0xcc]]
    %v875 = vstv %s874
    %v876 = vmul.f32 %v674, %v875
    %v877 = vadd.f32 %v873, %v876
    %s878 = sld [smem:[#allocation2 + $0xd4]]
    %v879 = vstv %s878
    %v880 = vmul.f32 %v693, %v879
    %v881 = vadd.f32 %v877, %v880
    %s882 = sld [smem:[#allocation2 + $0xdc]]
    %v883 = vstv %s882
    %v884 = vmul.f32 %v712, %v883
    %v885 = vadd.f32 %v881, %v884
    %s886 = sld [smem:[#allocation2 + $0xe4]]
    %v887 = vstv %s886
    %v888 = vmul.f32 %v731, %v887
    %v889 = vadd.f32 %v885, %v888
    %s890 = sld [smem:[#allocation2 + $0xec]]
    %v891 = vstv %s890
    %v892 = vadd.f32 %v889, %v891
    %v893 = vtanh.pop %v892
    %s894 = sld [smem:[#allocation2 + $0xbd]]
    %v895 = vstv %s894
    %v896 = vmul.f32 %v636, %v895
    %s897 = sld [smem:[#allocation2 + $0xc5]]
    %v898 = vstv %s897
    %v899 = vmul.f32 %v655, %v898
    %v900 = vadd.f32 %v896, %v899
    %s901 = sld [smem:[#allocation2 + $0xcd]]
    %v902 = vstv %s901
    %v903 = vmul.f32 %v674, %v902
    %v904 = vadd.f32 %v900, %v903
    %s905 = sld [smem:[#allocation2 + $0xd5]]
    %v906 = vstv %s905
    %v907 = vmul.f32 %v693, %v906
    %v908 = vadd.f32 %v904, %v907
    %s909 = sld [smem:[#allocation2 + $0xdd]]
    %v910 = vstv %s909
    %v911 = vmul.f32 %v712, %v910
    %v912 = vadd.f32 %v908, %v911
    %s913 = sld [smem:[#allocation2 + $0xe5]]
    %v914 = vstv %s913
    %v915 = vmul.f32 %v731, %v914
    %v916 = vadd.f32 %v912, %v915
    %s917 = sld [smem:[#allocation2 + $0xed]]
    %v918 = vstv %s917
    %v919 = vadd.f32 %v916, %v918
    %v920 = vtanh.pop %v919
    %s921 = sld [smem:[#allocation2 + $0xbe]]
    %v922 = vstv %s921
    %v923 = vmul.f32 %v636, %v922
    %s924 = sld [smem:[#allocation2 + $0xc6]]
    %v925 = vstv %s924
    %v926 = vmul.f32 %v655, %v925
    %v927 = vadd.f32 %v923, %v926
    %s928 = sld [smem:[#allocation2 + $0xce]]
    %v929 = vstv %s928
    %v930 = vmul.f32 %v674, %v929
    %v931 = vadd.f32 %v927, %v930
    %s932 = sld [smem:[#allocation2 + $0xd6]]
    %v933 = vstv %s932
    %v934 = vmul.f32 %v693, %v933
    %v935 = vadd.f32 %v931, %v934
    %s936 = sld [smem:[#allocation2 + $0xde]]
    %v937 = vstv %s936
    %v938 = vmul.f32 %v712, %v937
    %v939 = vadd.f32 %v935, %v938
    %s940 = sld [smem:[#allocation2 + $0xe6]]
    %v941 = vstv %s940
    %v942 = vmul.f32 %v731, %v941
    %v943 = vadd.f32 %v939, %v942
    %s944 = sld [smem:[#allocation2 + $0xee]]
    %v945 = vstv %s944
    %v946 = vadd.f32 %v943, %v945
    %v947 = vtanh.pop %v946
    %s948 = sld [smem:[#allocation2 + $0xef]]
    %v949 = vstv %s948
    %v950 = vmul.f32 %v758, %v949
    %s951 = sld [smem:[#allocation2 + $0xf3]]
    %v952 = vstv %s951
    %v953 = vmul.f32 %v785, %v952
    %v954 = vadd.f32 %v950, %v953
    %s955 = sld [smem:[#allocation2 + $0xf7]]
    %v956 = vstv %s955
    %v957 = vmul.f32 %v812, %v956
    %v958 = vadd.f32 %v954, %v957
    %s959 = sld [smem:[#allocation2 + $0xfb]]
    %v960 = vstv %s959
    %v961 = vmul.f32 %v839, %v960
    %v962 = vadd.f32 %v958, %v961
    %s963 = sld [smem:[#allocation2 + $0xff]]
    %v964 = vstv %s963
    %v965 = vmul.f32 %v866, %v964
    %v966 = vadd.f32 %v962, %v965
    %s967 = sld [smem:[#allocation2 + $0x103]]
    %v968 = vstv %s967
    %v969 = vmul.f32 %v893, %v968
    %v970 = vadd.f32 %v966, %v969
    %s971 = sld [smem:[#allocation2 + $0x107]]
    %v972 = vstv %s971
    %v973 = vmul.f32 %v920, %v972
    %v974 = vadd.f32 %v970, %v973
    %s975 = sld [smem:[#allocation2 + $0x10b]]
    %v976 = vstv %s975
    %v977 = vmul.f32 %v947, %v976
    %v978 = vadd.f32 %v974, %v977
    %s979 = sld [smem:[#allocation2 + $0x10f]]
    %v980 = vstv %s979
    %v981 = vadd.f32 %v978, %v980
    %s982 = sld [smem:[#allocation2 + $0xf0]]
    %v983 = vstv %s982
    %v984 = vmul.f32 %v758, %v983
    %s985 = sld [smem:[#allocation2 + $0xf4]]
    %v986 = vstv %s985
    %v987 = vmul.f32 %v785, %v986
    %v988 = vadd.f32 %v984, %v987
    %s989 = sld [smem:[#allocation2 + $0xf8]]
    %v990 = vstv %s989
    %v991 = vmul.f32 %v812, %v990
    %v992 = vadd.f32 %v988, %v991
    %s993 = sld [smem:[#allocation2 + $0xfc]]
    %v994 = vstv %s993
    %v995 = vmul.f32 %v839, %v994
    %v996 = vadd.f32 %v992, %v995
    %s997 = sld [smem:[#allocation2 + $0x100]]
    %v998 = vstv %s997
    %v999 = vmul.f32 %v866, %v998
    %v1000 = vadd.f32 %v996, %v999
    %s1001 = sld [smem:[#allocation2 + $0x104]]
    %v1002 = vstv %s1001
    %v1003 = vmul.f32 %v893, %v1002
    %v1004 = vadd.f32 %v1000, %v1003
    %s1005 = sld [smem:[#allocation2 + $0x108]]
    %v1006 = vstv %s1005
    %v1007 = vmul.f32 %v920, %v1006
    %v1008 = vadd.f32 %v1004, %v1007
    %s1009 = sld [smem:[#allocation2 + $0x10c]]
    %v1010 = vstv %s1009
    %v1011 = vmul.f32 %v947, %v1010
    %v1012 = vadd.f32 %v1008, %v1011
    %s1013 = sld [smem:[#allocation2 + $0x110]]
    %v1014 = vstv %s1013
    %v1015 = vadd.f32 %v1012, %v1014
    %s1016 = sld [smem:[#allocation2 + $0xf1]]
    %v1017 = vstv %s1016
    %v1018 = vmul.f32 %v758, %v1017
    %s1019 = sld [smem:[#allocation2 + $0xf5]]
    %v1020 = vstv %s1019
    %v1021 = vmul.f32 %v785, %v1020
    %v1022 = vadd.f32 %v1018, %v1021
    %s1023 = sld [smem:[#allocation2 + $0xf9]]
    %v1024 = vstv %s1023
    %v1025 = vmul.f32 %v812, %v1024
    %v1026 = vadd.f32 %v1022, %v1025
    %s1027 = sld [smem:[#allocation2 + $0xfd]]
    %v1028 = vstv %s1027
    %v1029 = vmul.f32 %v839, %v1028
    %v1030 = vadd.f32 %v1026, %v1029
    %s1031 = sld [smem:[#allocation2 + $0x101]]
    %v1032 = vstv %s1031
    %v1033 = vmul.f32 %v866, %v1032
    %v1034 = vadd.f32 %v1030, %v1033
    %s1035 = sld [smem:[#allocation2 + $0x105]]
    %v1036 = vstv %s1035
    %v1037 = vmul.f32 %v893, %v1036
    %v1038 = vadd.f32 %v1034, %v1037
    %s1039 = sld [smem:[#allocation2 + $0x109]]
    %v1040 = vstv %s1039
    %v1041 = vmul.f32 %v920, %v1040
    %v1042 = vadd.f32 %v1038, %v1041
    %s1043 = sld [smem:[#allocation2 + $0x10d]]
    %v1044 = vstv %s1043
    %v1045 = vmul.f32 %v947, %v1044
    %v1046 = vadd.f32 %v1042, %v1045
    %s1047 = sld [smem:[#allocation2 + $0x111]]
    %v1048 = vstv %s1047
    %v1049 = vadd.f32 %v1046, %v1048
    %s1050 = sld [smem:[#allocation2 + $0xf2]]
    %v1051 = vstv %s1050
    %v1052 = vmul.f32 %v758, %v1051
    %s1053 = sld [smem:[#allocation2 + $0xf6]]
    %v1054 = vstv %s1053
    %v1055 = vmul.f32 %v785, %v1054
    %v1056 = vadd.f32 %v1052, %v1055
    %s1057 = sld [smem:[#allocation2 + $0xfa]]
    %v1058 = vstv %s1057
    %v1059 = vmul.f32 %v812, %v1058
    %v1060 = vadd.f32 %v1056, %v1059
    %s1061 = sld [smem:[#allocation2 + $0xfe]]
    %v1062 = vstv %s1061
    %v1063 = vmul.f32 %v839, %v1062
    %v1064 = vadd.f32 %v1060, %v1063
    %s1065 = sld [smem:[#allocation2 + $0x102]]
    %v1066 = vstv %s1065
    %v1067 = vmul.f32 %v866, %v1066
    %v1068 = vadd.f32 %v1064, %v1067
    %s1069 = sld [smem:[#allocation2 + $0x106]]
    %v1070 = vstv %s1069
    %v1071 = vmul.f32 %v893, %v1070
    %v1072 = vadd.f32 %v1068, %v1071
    %s1073 = sld [smem:[#allocation2 + $0x10a]]
    %v1074 = vstv %s1073
    %v1075 = vmul.f32 %v920, %v1074
    %v1076 = vadd.f32 %v1072, %v1075
    %s1077 = sld [smem:[#allocation2 + $0x10e]]
    %v1078 = vstv %s1077
    %v1079 = vmul.f32 %v947, %v1078
    %v1080 = vadd.f32 %v1076, %v1079
    %s1081 = sld [smem:[#allocation2 + $0x112]]
    %v1082 = vstv %s1081
    %v1083 = vadd.f32 %v1080, %v1082
    %1084 = vst [vmem:[%s2] sm:$0xff] %v981
    %s1085 = scalar_lea.vmem %s2, 8
    %1086 = vst [vmem:[%s1085] sm:$0xff] %v1015
    %s1087 = scalar_lea.vmem %s2, 16
    %1088 = vst [vmem:[%s1087] sm:$0xff] %v1049
    %s1089 = scalar_lea.vmem %s2, 24
    %1090 = vst [vmem:[%s1089] sm:$0xff] %v1083
    // Predicated region
    $region14: #{ae_big_forward.1} parent=1 // pred_check
      _
    $region15: #{ae_big_forward.1} parent=1 // pred_check_branch
      %1092 = sbr.rel (0) target = $region17
    $region16: #{ae_big_forward.1} parent=1 // pred_region
      _
    $region17: #{ae_big_forward.1} parent=1 // pred_fallthru
      _
    // Predicated region
    $region18: #{ae_big_forward.1} parent=1 // pred_check
      _
    $region19: #{ae_big_forward.1} parent=1 // pred_check_branch
      %1094 = sbr.rel (0) target = $region21
    $region20: #{ae_big_forward.1} parent=1 // pred_region
      _
    $region21: #{ae_big_forward.1} parent=1 // pred_fallthru
      _
    %1095 = vsyncpa [#allocation3], 1

</llo_original>
